<compile_context>
chip_gen: v6e
topology: v6e:2x2x1
jax: 0.10.0
libtpu: 0.0.40
codegen_flags: <defaults>
</compile_context>

<pallas_src>
import functools

import jax
import jax.numpy as jnp
from jax.experimental import pallas as pl
from jax.experimental.pallas import tpu as pltpu

NoActivation = "activation.none"
Relu = "activation.relu"
Sigmoid = "activation.sigmoid"
Tanh = "activation.tanh"

_LANE = 128


def _conv_act_kernel(x_ref, w_ref, b_ref, o_ref, xpad_ref, *, activation, pad, KH, KW):
    """One (batch element, Cout tile) per grid step.

    x_ref:    (1, H, W, Cin)            un-padded NHWC input tile
    w_ref:    (KH*KW*Cin, TCOUT)        flattened (+lane-padded) weights
    b_ref:    (1, TCOUT)                f32 bias (lane-padded)
    o_ref:    (1, H*W, TCOUT)           lane-dense output slab
    xpad_ref: (H+2p, W+2p, Cin) VMEM    halo scratch (padding never touches HBM)
    """
    _, H, W, Cin = x_ref.shape

    # Zero-fill the halo scratch (tiny: (H+2p)*(W+2p)*Cin elems), then write the interior.
    # Full-fill every step keeps this correct under megacore grid sharding (scratch is
    # per-core; a "first-step-only" init would leave one core's halo uninitialized).
    xpad_ref[...] = jnp.zeros(xpad_ref.shape, xpad_ref.dtype)
    xpad_ref[pad:pad + H, pad:pad + W, :] = x_ref[0]

    # im2col: build the (H*W, KH*KW*Cin) LHS once per block, then a single fused
    # MXU matmul (contraction K = KH*KW*Cin) instead of KH*KW tiny K=Cin matmuls.
    cols = []
    for kh in range(KH):
        for kw in range(KW):
            cols.append(xpad_ref[kh:kh + H, kw:kw + W, :].reshape(H * W, Cin))
    lhs = jnp.concatenate(cols, axis=-1)                       # (H*W, KH*KW*Cin)

    acc = jnp.dot(lhs, w_ref[...], preferred_element_type=jnp.float32)  # (H*W, TCOUT) f32
    acc = acc + b_ref[...]                                     # bias add in f32

    # Activation math stays in f32 (v5e VPU/EUP has no bf16 path); cast only at the store.
    if activation == Relu:
        acc = jnp.maximum(acc, 0.0)
    elif activation == Sigmoid:
        acc = jax.nn.sigmoid(acc)
    elif activation == Tanh:
        acc = jnp.tanh(acc)
    elif activation == NoActivation:
        pass
    else:
        raise ValueError(f"Invalid activation function: {activation}")

    o_ref[0] = acc.astype(o_ref.dtype)


@functools.partial(jax.jit, static_argnums=(3, 4))
def convolutional_layer_nhwc(x_nhwc, w_oihw, bias, activation=Relu, compute_dtype=None):
    """NHWC-native path (preferred end-to-end: no layout transposes)."""
    N, H, W, Cin = x_nhwc.shape
    Cout, Cin_w, KH, KW = w_oihw.shape
    assert Cin_w == Cin
    # padding = kernel_size // 2 "same" conv semantics require an odd, square kernel.
    assert KH == KW and KH % 2 == 1, "ConvolutionalLayer expects odd square kernels"
    pad = KH // 2

    out_dtype = x_nhwc.dtype
    if compute_dtype is None:
        compute_dtype = out_dtype

    cout_pad = ((Cout + _LANE - 1) // _LANE) * _LANE
    tcout = _LANE
    n_cout_tiles = cout_pad // tcout

    # Weight / bias prep (tiny; in a real model these would be pre-packed once).
    w_hwio = jnp.transpose(w_oihw, (2, 3, 1, 0))               # (KH, KW, Cin, Cout)
    w_flat = w_hwio.reshape(KH * KW * Cin, Cout)               # row = (kh*KW+kw)*Cin + ci
    w_flat = jnp.pad(w_flat, ((0, 0), (0, cout_pad - Cout))).astype(compute_dtype)
    b_pad = jnp.pad(bias.astype(jnp.float32), (0, cout_pad - Cout)).reshape(1, cout_pad)

    xc = x_nhwc.astype(compute_dtype)

    kernel = functools.partial(
        _conv_act_kernel, activation=activation, pad=pad, KH=KH, KW=KW)

    # TODO(synk): for large spatial sizes, add an H-row grid axis with a (KH-1)-row halo
    # and tile Cout further so 2*(in_tile+out_tile)+weights stays under ~24-32 MiB
    # (v7x has only 64 MiB VMEM); at 16x16x4/8 a whole image per step is well inside budget.
    out = pl.pallas_call(
        kernel,
        out_shape=jax.ShapeDtypeStruct((N, H * W, cout_pad), out_dtype),
        grid_spec=pltpu.PrefetchScalarGridSpec(
            num_scalar_prefetch=0,
            grid=(N, n_cout_tiles),
            in_specs=[
                pl.BlockSpec((1, H, W, Cin), lambda n, j: (n, 0, 0, 0)),
                pl.BlockSpec((KH * KW * Cin, tcout), lambda n, j: (0, j)),
                pl.BlockSpec((1, tcout), lambda n, j: (0, j)),
            ],
            out_specs=pl.BlockSpec((1, H * W, tcout), lambda n, j: (n, 0, j)),
            scratch_shapes=[
                pltpu.VMEM((H + 2 * pad, W + 2 * pad, Cin), compute_dtype),
            ],
        ),
        compiler_params=pltpu.CompilerParams(
            dimension_semantics=("parallel", "parallel"),
            vmem_limit_bytes=32 * 1024 * 1024,
        ),
    )(xc, w_flat, b_pad)

    if cout_pad != Cout:
        out = out[:, :, :Cout]
    return out.reshape(N, H, W, Cout)


@functools.partial(jax.jit, static_argnums=(3, 4))
def convolutional_layer(x_nchw, w_oihw, bias, activation=Relu, compute_dtype=None):
    """PyTorch-convention (NCHW) compatibility wrapper around the NHWC kernel."""
    x_nhwc = jnp.transpose(x_nchw, (0, 2, 3, 1))
    out_nhwc = convolutional_layer_nhwc(x_nhwc, w_oihw, bias, activation, compute_dtype)
    return jnp.transpose(out_nhwc, (0, 3, 1, 2))


if __name__ == "__main__":
    # Small shapes consistent with the module: batch=2, Cin=4, Cout=8, 16x16 spatial, k=3.
    N, Cin, Cout, H, W, K = 2, 4, 8, 16, 16, 3

    key = jax.random.PRNGKey(0)
    kx, kw, kb = jax.random.split(key, 3)

    fan_in = Cin * K * K
    bound = float(1.0 / (fan_in ** 0.5))
    x = jax.random.normal(kx, (N, Cin, H, W), dtype=jnp.float32)
    w = jax.random.uniform(kw, (Cout, Cin, K, K), minval=-bound, maxval=bound,
                           dtype=jnp.float32)
    b = jax.random.uniform(kb, (Cout,), minval=-bound, maxval=bound, dtype=jnp.float32)

    # f32 compute path.
    out = convolutional_layer(x, w, b, Relu, jnp.float32)
    out = jax.block_until_ready(out)

    # Reference: XLA conv (same semantics as nn.Conv2d(stride=1, padding=k//2) + ReLU).
    pad = K // 2
    ref = jax.lax.conv_general_dilated(
        x, w, window_strides=(1, 1), padding=((pad, pad), (pad, pad)),
        dimension_numbers=("NCHW", "OIHW", "NCHW"))
    ref = jnp.maximum(ref + b.reshape(1, Cout, 1, 1), 0.0)

    assert out.shape == (N, Cout, H, W)
    assert jnp.allclose(out, ref, atol=1e-4, rtol=1e-4)

    # Also exercise the other activations for coverage of the module's branches.
    for act, fn in ((Sigmoid, jax.nn.sigmoid), (Tanh, jnp.tanh), (NoActivation, lambda z: z)):
        got = jax.block_until_ready(convolutional_layer(x, w, b, act, jnp.float32))
        want = fn(jax.lax.conv_general_dilated(
            x, w, window_strides=(1, 1), padding=((pad, pad), (pad, pad)),
            dimension_numbers=("NCHW", "OIHW", "NCHW")) + b.reshape(1, Cout, 1, 1))
        assert jnp.allclose(got, want, atol=1e-4, rtol=1e-4)

    # bf16 compute path (v6e/v7x recommendation: halves input/weight HBM traffic,
    # f32 accumulation on the MXU). fp8 on v7x left as a further option.
    out_bf16 = jax.block_until_ready(convolutional_layer(x, w, b, Relu, jnp.bfloat16))
    assert jnp.allclose(out_bf16, ref, atol=5e-2, rtol=5e-2)

    print("KERNEL_OK")
</pallas_src>

<mosaic_0001>
module attributes {stable_mosaic.version = 11 : i64} {
  func.func @_conv_act_kernel(%arg0: i32, %arg1: i32, %arg2: memref<1x16x16x4xf32, #tpu.memory_space<vmem>>, %arg3: memref<36x128xf32, #tpu.memory_space<vmem>>, %arg4: memref<1x128xf32, #tpu.memory_space<vmem>>, %arg5: memref<1x256x128xf32, #tpu.memory_space<vmem>>, %arg6: memref<18x18x4xf32, #tpu.memory_space<vmem>>) attributes {dimension_semantics = [#tpu.dimension_semantics<parallel>, #tpu.dimension_semantics<parallel>], iteration_bounds = array<i64: 2, 1>, scalar_prefetch = 0 : i64, scratch_operands = 1 : i64, tpu.core_type = #tpu.core_type<tc>, window_params = [{transform_indices = @transform_0, window_bounds = array<i64: 1, 16, 16, 4>}, {transform_indices = @transform_1, window_bounds = array<i64: 36, 128>}, {transform_indices = @transform_2, window_bounds = array<i64: 1, 128>}, {transform_indices = @transform_3, window_bounds = array<i64: 1, 256, 128>}]} {
    %cst = arith.constant 0.000000e+00 : f32
    %0 = vector.broadcast %cst : f32 to vector<18x18x4xf32>
    %c0 = arith.constant 0 : index
    %c0_0 = arith.constant 0 : index
    %c0_1 = arith.constant 0 : index
    %1 = vector.load %arg6[%c0, %c0_0, %c0_1] : memref<18x18x4xf32, #tpu.memory_space<vmem>>, vector<18x18x4xf32>
    tpu.vector_store %arg6[%c0, %c0_0, %c0_1], %0 {strides = array<i32>} : memref<18x18x4xf32, #tpu.memory_space<vmem>>, vector<18x18x4xf32>,
    %c0_2 = arith.constant 0 : index
    %c0_3 = arith.constant 0 : index
    %c0_4 = arith.constant 0 : index
    %c0_5 = arith.constant 0 : index
    %2 = vector.load %arg2[%c0_2, %c0_3, %c0_4, %c0_5] : memref<1x16x16x4xf32, #tpu.memory_space<vmem>>, vector<1x16x16x4xf32>
    %3 = vector.shape_cast %2 : vector<1x16x16x4xf32> to vector<16x16x4xf32>
    %c1 = arith.constant 1 : index
    %c1_6 = arith.constant 1 : index
    %c0_7 = arith.constant 0 : index
    %4 = vector.load %arg6[%c1, %c1_6, %c0_7] : memref<18x18x4xf32, #tpu.memory_space<vmem>>, vector<16x16x4xf32>
    tpu.vector_store %arg6[%c1, %c1_6, %c0_7], %3 {strides = array<i32>} : memref<18x18x4xf32, #tpu.memory_space<vmem>>, vector<16x16x4xf32>,
    %c0_8 = arith.constant 0 : index
    %c0_9 = arith.constant 0 : index
    %c0_10 = arith.constant 0 : index
    %5 = vector.load %arg6[%c0_8, %c0_9, %c0_10] : memref<18x18x4xf32, #tpu.memory_space<vmem>>, vector<16x16x4xf32>
    %6 = vector.shape_cast %5 : vector<16x16x4xf32> to vector<256x4xf32>
    %c0_11 = arith.constant 0 : index
    %c1_12 = arith.constant 1 : index
    %c0_13 = arith.constant 0 : index
    %7 = vector.load %arg6[%c0_11, %c1_12, %c0_13] : memref<18x18x4xf32, #tpu.memory_space<vmem>>, vector<16x16x4xf32>
    %8 = vector.shape_cast %7 : vector<16x16x4xf32> to vector<256x4xf32>
    %c0_14 = arith.constant 0 : index
    %c2 = arith.constant 2 : index
    %c0_15 = arith.constant 0 : index
    %9 = vector.load %arg6[%c0_14, %c2, %c0_15] : memref<18x18x4xf32, #tpu.memory_space<vmem>>, vector<16x16x4xf32>
    %10 = vector.shape_cast %9 : vector<16x16x4xf32> to vector<256x4xf32>
    %c1_16 = arith.constant 1 : index
    %c0_17 = arith.constant 0 : index
    %c0_18 = arith.constant 0 : index
    %11 = vector.load %arg6[%c1_16, %c0_17, %c0_18] : memref<18x18x4xf32, #tpu.memory_space<vmem>>, vector<16x16x4xf32>
    %12 = vector.shape_cast %11 : vector<16x16x4xf32> to vector<256x4xf32>
    %c1_19 = arith.constant 1 : index
    %c1_20 = arith.constant 1 : index
    %c0_21 = arith.constant 0 : index
    %13 = vector.load %arg6[%c1_19, %c1_20, %c0_21] : memref<18x18x4xf32, #tpu.memory_space<vmem>>, vector<16x16x4xf32>
    %14 = vector.shape_cast %13 : vector<16x16x4xf32> to vector<256x4xf32>
    %c1_22 = arith.constant 1 : index
    %c2_23 = arith.constant 2 : index
    %c0_24 = arith.constant 0 : index
    %15 = vector.load %arg6[%c1_22, %c2_23, %c0_24] : memref<18x18x4xf32, #tpu.memory_space<vmem>>, vector<16x16x4xf32>
    %16 = vector.shape_cast %15 : vector<16x16x4xf32> to vector<256x4xf32>
    %c2_25 = arith.constant 2 : index
    %c0_26 = arith.constant 0 : index
    %c0_27 = arith.constant 0 : index
    %17 = vector.load %arg6[%c2_25, %c0_26, %c0_27] : memref<18x18x4xf32, #tpu.memory_space<vmem>>, vector<16x16x4xf32>
    %18 = vector.shape_cast %17 : vector<16x16x4xf32> to vector<256x4xf32>
    %c2_28 = arith.constant 2 : index
    %c1_29 = arith.constant 1 : index
    %c0_30 = arith.constant 0 : index
    %19 = vector.load %arg6[%c2_28, %c1_29, %c0_30] : memref<18x18x4xf32, #tpu.memory_space<vmem>>, vector<16x16x4xf32>
    %20 = vector.shape_cast %19 : vector<16x16x4xf32> to vector<256x4xf32>
    %c2_31 = arith.constant 2 : index
    %c2_32 = arith.constant 2 : index
    %c0_33 = arith.constant 0 : index
    %21 = vector.load %arg6[%c2_31, %c2_32, %c0_33] : memref<18x18x4xf32, #tpu.memory_space<vmem>>, vector<16x16x4xf32>
    %22 = vector.shape_cast %21 : vector<16x16x4xf32> to vector<256x4xf32>
    %23 = tpu.concatenate %6, %8, %10, %12, %14, %16, %18, %20, %22 in 1 : vector<256x4xf32>, vector<256x4xf32>, vector<256x4xf32>, vector<256x4xf32>, vector<256x4xf32>, vector<256x4xf32>, vector<256x4xf32>, vector<256x4xf32>, vector<256x4xf32> -> vector<256x36xf32>
    %c0_34 = arith.constant 0 : index
    %c0_35 = arith.constant 0 : index
    %24 = vector.load %arg3[%c0_34, %c0_35] : memref<36x128xf32, #tpu.memory_space<vmem>>, vector<36x128xf32>
    %cst_36 = arith.constant dense<0.000000e+00> : vector<256x128xf32>
    %25 = tpu.matmul %23, %24, %cst_36 {dimension_numbers = #tpu.dot_dimension_numbers<[1], [0], [0], [1], [0, 0, 1, 1], [], []>} : vector<256x36xf32>, vector<36x128xf32>, vector<256x128xf32> -> vector<256x128xf32>
    %c0_37 = arith.constant 0 : index
    %c0_38 = arith.constant 0 : index
    %26 = vector.load %arg4[%c0_37, %c0_38] : memref<1x128xf32, #tpu.memory_space<vmem>>, vector<1x128xf32>
    %27 = vector.broadcast %26 : vector<1x128xf32> to vector<256x128xf32>
    %28 = arith.addf %25, %27 : vector<256x128xf32>
    %cst_39 = arith.constant 0.000000e+00 : f32
    %29 = vector.broadcast %cst_39 : f32 to vector<256x128xf32>
    %30 = arith.maximumf %28, %29 : vector<256x128xf32>
    %c0_40 = arith.constant 0 : index
    %c0_41 = arith.constant 0 : index
    %c0_42 = arith.constant 0 : index
    %31 = vector.load %arg5[%c0_40, %c0_41, %c0_42] : memref<1x256x128xf32, #tpu.memory_space<vmem>>, vector<1x256x128xf32>
    %32 = vector.shape_cast %31 : vector<1x256x128xf32> to vector<256x128xf32>
    %33 = vector.shape_cast %30 : vector<256x128xf32> to vector<1x256x128xf32>
    tpu.vector_store %arg5[%c0_40, %c0_41, %c0_42], %33 {strides = array<i32>} : memref<1x256x128xf32, #tpu.memory_space<vmem>>, vector<1x256x128xf32>,
    return
  }
  func.func @transform_0(%arg0: i32, %arg1: i32) -> (i32, i32, i32, i32) {
    %c0_i32 = arith.constant 0 : i32
    %c0_i32_0 = arith.constant 0 : i32
    %c0_i32_1 = arith.constant 0 : i32
    %c0_i32_2 = arith.constant 0 : i32
    return %arg0, %c0_i32, %c0_i32_0, %c0_i32_1 : i32, i32, i32, i32
  }
  func.func @transform_1(%arg0: i32, %arg1: i32) -> (i32, i32) {
    %c0_i32 = arith.constant 0 : i32
    %c0_i32_0 = arith.constant 0 : i32
    return %c0_i32, %arg1 : i32, i32
  }
  func.func @transform_2(%arg0: i32, %arg1: i32) -> (i32, i32) {
    %c0_i32 = arith.constant 0 : i32
    %c0_i32_0 = arith.constant 0 : i32
    return %c0_i32, %arg1 : i32, i32
  }
  func.func @transform_3(%arg0: i32, %arg1: i32) -> (i32, i32, i32) {
    %c0_i32 = arith.constant 0 : i32
    %c0_i32_0 = arith.constant 0 : i32
    return %arg0, %c0_i32, %arg1 : i32, i32, i32
  }
}

</mosaic_0001>

<llo_original>
// kernel: convolutional_layer_nhwc.1
$region0: #{convolutional_layer_nhwc.1}
  #allocation0 [shape = 'u32[]', space=smem, size = 0x4, offset = 0x4, fixed_abs, tag = 'smem constant byte address 0x4 - core index']
  #allocation1 [shape = 'u32[144,128]{1,0:T(1,128)}', space=vmem, size = 0x12000, scoped, tag = 'internal scratch']
  #allocation2 [shape = 'f32[18,18,4]{2,1,0:T(8,128)}', space=vmem, size = 0x36000, scoped, tag = 'scratch operand']
  %s0 = inlined_call_operand.vmem [shape: f32[2,16,16,4], index: 0, kind: input, shape index: {}]
  %s1 = inlined_call_operand.vmem [shape: f32[36,128], index: 1, kind: input, shape index: {}]
  %s2 = inlined_call_operand.vmem [shape: f32[1,128], index: 2, kind: input, shape index: {}]
  %s3 = inlined_call_operand.vmem [shape: f32[2,256,128], index: 3, kind: output, shape index: {}]
  %s4 = sld [smem:[#allocation0]]
  $region45: #{convolutional_layer_nhwc.1} parent=0
    _
  %s6 = ssub.s32 1, %s4
  %s7 = scalar_select 0, %s6, %s4
  loop: start=0, step=1, limit=4
  $region2: #{convolutional_layer_nhwc.1} parent=0 // loop_pre_header
    _
  $region3: #{convolutional_layer_nhwc.1} parent=0 // loop_header
    %s9 = sphi 0, %s13
    %p10 = scmp.ge.s32.totalorder %s9, 4
    %s16 = sphi 0, %s28
    %s17 = sphi 0, %s24
    %s18 = sphi 0, %s16
    %s19 = sphi 0, %s17
    %s20 = sphi 0, %s18
    %s21 = sphi 0, %s19
    %s31 = sphi 0, %s33
    %s34 = sphi 0, %s31
    %s35 = sphi 0, %s34
    %s51 = sphi 0, %s35
    %s57 = sphi 0, %s59
    %s60 = sphi 0, %s57
    %s61 = sphi 0, %s60
    %s77 = sphi 0, %s61
    %s83 = sphi 0, %s85
    %s86 = sphi 0, %s83
    %s87 = sphi 0, %s86
    %s103 = sphi 0, %s87
    %s111 = sphi 0, %s113
    %s114 = sphi 0, %s111
    %s115 = sphi 0, %s114
    %s131 = sphi 0, %s115
  $region4: #{convolutional_layer_nhwc.1} parent=0 // loop_header_branch
    %12 = sbr.rel (%p10) target = $region8
  $region5: #{convolutional_layer_nhwc.1} parent=0 // loop_body
    %s14 = ssub.s32 %s9, 1
    %s15 = ssub.s32 %s9, 2
    %s22 = sadd.s32 1, %s17
    %p23 = scmp.ge.s32.totalorder %s22, 1
    %s24 = scalar_select %p23, 0, %s22
    %s25 = sadd.s32 1, %s16
    %s26 = scalar_select %p23, %s25, %s16
    %p27 = scmp.ge.s32.totalorder %s26, 2
    %s28 = scalar_select %p27, 0, %s26
    %s29 = ssub.s32 %s16, %s28
    %p30 = scmp.eq.s32.totalorder %s29, 0
    %s32 = sadd.s32 %s31, 1
    %s33 = scalar_select %p30, %s31, %s32
    %p36 = pneg %p30
    %p37 = scmp.eq.s32.totalorder %s9, 1
    %p38 = por %p36, %p37
    %p39 = scmp.ne.s32.totalorder %s31, %s34
    %p40 = scmp.eq.s32.totalorder %s9, 0
    %p41 = por %p39, %p40
    %p42 = scmp.ne.s32.totalorder %s31, %s34
    %p43 = scmp.eq.s32.totalorder %s14, 1
    %p44 = por %p42, %p43
    %p45 = scmp.ne.s32.totalorder %s34, %s35
    %p46 = scmp.eq.s32.totalorder %s14, 0
    %p47 = por %p45, %p46
    %p48 = scmp.ne.s32.totalorder %s34, %s35
    %p49 = scmp.eq.s32.totalorder %s15, 1
    %p50 = por %p48, %p49
    %p52 = scmp.ne.s32.totalorder %s35, %s51
    %p53 = scmp.eq.s32.totalorder %s15, 0
    %p54 = por %p52, %p53
    %s55 = ssub.s32 %s17, %s24
    %p56 = scmp.eq.s32.totalorder %s55, 0
    %s58 = sadd.s32 %s57, 1
    %s59 = scalar_select %p56, %s57, %s58
    %p62 = pneg %p56
    %p63 = scmp.eq.s32.totalorder %s9, 1
    %p64 = por %p62, %p63
    %p65 = scmp.ne.s32.totalorder %s57, %s60
    %p66 = scmp.eq.s32.totalorder %s9, 0
    %p67 = por %p65, %p66
    %p68 = scmp.ne.s32.totalorder %s57, %s60
    %p69 = scmp.eq.s32.totalorder %s14, 1
    %p70 = por %p68, %p69
    %p71 = scmp.ne.s32.totalorder %s60, %s61
    %p72 = scmp.eq.s32.totalorder %s14, 0
    %p73 = por %p71, %p72
    %p74 = scmp.ne.s32.totalorder %s60, %s61
    %p75 = scmp.eq.s32.totalorder %s15, 1
    %p76 = por %p74, %p75
    %p78 = scmp.ne.s32.totalorder %s61, %s77
    %p79 = scmp.eq.s32.totalorder %s15, 0
    %p80 = por %p78, %p79
    %s81 = ssub.s32 %s17, %s24
    %p82 = scmp.eq.s32.totalorder %s81, 0
    %s84 = sadd.s32 %s83, 1
    %s85 = scalar_select %p82, %s83, %s84
    %p88 = pneg %p82
    %p89 = scmp.eq.s32.totalorder %s9, 1
    %p90 = por %p88, %p89
    %p91 = scmp.ne.s32.totalorder %s83, %s86
    %p92 = scmp.eq.s32.totalorder %s9, 0
    %p93 = por %p91, %p92
    %p94 = scmp.ne.s32.totalorder %s83, %s86
    %p95 = scmp.eq.s32.totalorder %s14, 1
    %p96 = por %p94, %p95
    %p97 = scmp.ne.s32.totalorder %s86, %s87
    %p98 = scmp.eq.s32.totalorder %s14, 0
    %p99 = por %p97, %p98
    %p100 = scmp.ne.s32.totalorder %s86, %s87
    %p101 = scmp.eq.s32.totalorder %s15, 1
    %p102 = por %p100, %p101
    %p104 = scmp.ne.s32.totalorder %s87, %s103
    %p105 = scmp.eq.s32.totalorder %s15, 0
    %p106 = por %p104, %p105
    %s107 = ssub.s32 %s16, %s28
    %s108 = ssub.s32 %s17, %s24
    %s109 = sor.u32 %s107, %s108
    %p110 = scmp.eq.s32.totalorder %s109, 0
    %s112 = sadd.s32 %s111, 1
    %s113 = scalar_select %p110, %s111, %s112
    %p116 = pneg %p110
    %p117 = scmp.eq.s32.totalorder %s9, 1
    %p118 = por %p116, %p117
    %p119 = scmp.ne.s32.totalorder %s111, %s114
    %p120 = scmp.eq.s32.totalorder %s9, 0
    %p121 = por %p119, %p120
    %p122 = scmp.ne.s32.totalorder %s111, %s114
    %p123 = scmp.eq.s32.totalorder %s14, 1
    %p124 = por %p122, %p123
    %p125 = scmp.ne.s32.totalorder %s114, %s115
    %p126 = scmp.eq.s32.totalorder %s14, 0
    %p127 = por %p125, %p126
    %p128 = scmp.ne.s32.totalorder %s114, %s115
    %p129 = scmp.eq.s32.totalorder %s15, 1
    %p130 = por %p128, %p129
    %p132 = scmp.ne.s32.totalorder %s115, %s131
    %p133 = scmp.eq.s32.totalorder %s15, 0
    %p134 = por %p132, %p133
    %p135 = scmp.le.s32.totalorder 1, %s9
    %p136 = scmp.lt.s32.totalorder %s9, 3
    %p137 = pnand %p135, %p136
    %p138 = pneg %p137
    // Predicated region
    $region9: #{convolutional_layer_nhwc.1} parent=5 // pred_check
      _
    $region10: #{convolutional_layer_nhwc.1} parent=5 // pred_check_branch
      %140 = sbr.rel (%p137) target = $region12
    $region11: #{convolutional_layer_nhwc.1} parent=5 // pred_region
      %s141 = ssub.s32 %s9, 1
      // Predicated region
      $region13: #{convolutional_layer_nhwc.1} parent=11 // pred_check
        %p142 = pneg %p73
      $region14: #{convolutional_layer_nhwc.1} parent=11 // pred_check_branch
        %144 = sbr.rel (%p142) target = $region16
      $region15: #{convolutional_layer_nhwc.1} parent=11 // pred_region
        %p145 = scmp.lt.s32.totalorder %s19, 0
        %s146 = scalar_select %p145, %s19, 0
        %s147 = smul.addr %s146, 8
        %s148 = scalar_lea.vmem %s1, %s147
      $region16: #{convolutional_layer_nhwc.1} parent=11 // pred_fallthru
        _
      // Predicated region
      $region17: #{convolutional_layer_nhwc.1} parent=11 // pred_check
        %p149 = pneg %p99
      $region18: #{convolutional_layer_nhwc.1} parent=11 // pred_check_branch
        %151 = sbr.rel (%p149) target = $region20
      $region19: #{convolutional_layer_nhwc.1} parent=11 // pred_region
        %p152 = scmp.lt.s32.totalorder %s19, 0
        %s153 = scalar_select %p152, %s19, 0
        %s154 = scalar_lea.vmem %s2, %s153
      $region20: #{convolutional_layer_nhwc.1} parent=11 // pred_fallthru
        _
    $region12: #{convolutional_layer_nhwc.1} parent=5 // pred_fallthru
      _
    %p155 = scmp.lt.s32.totalorder %s9, 2
    // Predicated region
    $region21: #{convolutional_layer_nhwc.1} parent=5 // pred_check
      %p156 = pneg %p155
    $region22: #{convolutional_layer_nhwc.1} parent=5 // pred_check_branch
      %158 = sbr.rel (%p156) target = $region24
    $region23: #{convolutional_layer_nhwc.1} parent=5 // pred_region
      // Predicated region
      $region25: #{convolutional_layer_nhwc.1} parent=23 // pred_check
        %p159 = pneg %p41
      $region26: #{convolutional_layer_nhwc.1} parent=23 // pred_check_branch
        %161 = sbr.rel (%p159) target = $region28
      $region27: #{convolutional_layer_nhwc.1} parent=23 // pred_region
        %p162 = scmp.lt.s32.totalorder %s16, 1
        %s163 = scalar_select %p162, %s16, 1
        %s164 = smul.addr %s163, 32
        %s165 = smul.addr %s164, 8
        %s166 = scalar_lea.vmem %s0, %s165
      $region28: #{convolutional_layer_nhwc.1} parent=23 // pred_fallthru
        _
    $region24: #{convolutional_layer_nhwc.1} parent=5 // pred_fallthru
      _
    %p167 = scmp.le.s32.totalorder 1, %s9
    %p168 = scmp.lt.s32.totalorder %s9, 3
    %p169 = pnand %p167, %p168
    %p170 = pneg %p169
    // Predicated region
    $region29: #{convolutional_layer_nhwc.1} parent=5 // pred_check
      _
    $region30: #{convolutional_layer_nhwc.1} parent=5 // pred_check_branch
      %172 = sbr.rel (%p169) target = $region32
    $region31: #{convolutional_layer_nhwc.1} parent=5 // pred_region
      %s173 = ssub.s32 %s9, 1
      %p174 = scmp.lt.s32.totalorder %s18, 1
      %s175 = scalar_select %p174, %s18, 1
      %s176 = smul.addr %s175, 32
      %s177 = smul.addr %s176, 8
      %s178 = scalar_lea.vmem %s0, %s177
      %p179 = pneg %p47
      %p180 = pneg %p44
      %p181 = scmp.lt.s32.totalorder %s19, 0
      %s182 = scalar_select %p181, %s19, 0
      %s183 = smul.addr %s182, 8
      %s184 = scalar_lea.vmem %s1, %s183
      %p185 = pneg %p73
      %p186 = pneg %p70
      %p187 = scmp.lt.s32.totalorder %s19, 0
      %s188 = scalar_select %p187, %s19, 0
      %s189 = scalar_lea.vmem %s2, %s188
      %p190 = pneg %p99
      %p191 = pneg %p96
      %p192 = pneg %p127
      %p193 = pneg %p124
      %p194 = scmp.lt.s32.totalorder %s18, 1
      %s195 = scalar_select %p194, %s18, 1
      %p196 = scmp.lt.s32.totalorder %s19, 0
      %s197 = scalar_select %p196, %s19, 0
      %s198 = smul.addr %s195, 32
      %s199 = sadd.s32 %s197, %s198
      %s200 = smul.addr %s199, 8
      %s201 = scalar_lea.vmem %s3, %s200
      %p202 = scmp.lt.s32.totalorder %s18, 1
      %s203 = scalar_select %p202, %s18, 1
      %s204 = smul.addr %s203, 32
      %s205 = smul.addr %s204, 8
      %s206 = scalar_lea.vmem %s0, %s205
      %p207 = scmp.lt.s32.totalorder %s19, 0
      %s208 = scalar_select %p207, %s19, 0
      %s209 = smul.addr %s208, 8
      %s210 = scalar_lea.vmem %s1, %s209
      %p211 = scmp.lt.s32.totalorder %s19, 0
      %s212 = scalar_select %p211, %s19, 0
      %s213 = scalar_lea.vmem %s2, %s212
      %p214 = scmp.lt.s32.totalorder %s18, 1
      %s215 = scalar_select %p214, %s18, 1
      %p216 = scmp.lt.s32.totalorder %s19, 0
      %s217 = scalar_select %p216, %s19, 0
      %s218 = smul.addr %s215, 32
      %s219 = sadd.s32 %s217, %s218
      %s220 = smul.addr %s219, 8
      %s221 = scalar_lea.vmem %s3, %s220
      %vm222 = vcmask 31744
      %223 = vst.msk [vmem:[#allocation2] sm:$0xff] %vm222, 0.0
      %224 = vst.msk [vmem:[#allocation2 + $0x8] sm:$0xff] %vm222, 0.0
      %vm225 = vcmask 25600
      %226 = vst.msk [vmem:[#allocation2 + $0x10] sm:$0x3] %vm225, 0.0
      %227 = vst.msk [vmem:[#allocation2 + $0x18] sm:$0xff] %vm222, 0.0
      %228 = vst.msk [vmem:[#allocation2 + $0x20] sm:$0xff] %vm222, 0.0
      %229 = vst.msk [vmem:[#allocation2 + $0x28] sm:$0x3] %vm225, 0.0
      %230 = vst.msk [vmem:[#allocation2 + $0x30] sm:$0xff] %vm222, 0.0
      %231 = vst.msk [vmem:[#allocation2 + $0x38] sm:$0xff] %vm222, 0.0
      %232 = vst.msk [vmem:[#allocation2 + $0x40] sm:$0x3] %vm225, 0.0
      %233 = vst.msk [vmem:[#allocation2 + $0x48] sm:$0xff] %vm222, 0.0
      %234 = vst.msk [vmem:[#allocation2 + $0x50] sm:$0xff] %vm222, 0.0
      %235 = vst.msk [vmem:[#allocation2 + $0x58] sm:$0x3] %vm225, 0.0
      %236 = vst.msk [vmem:[#allocation2 + $0x60] sm:$0xff] %vm222, 0.0
      %237 = vst.msk [vmem:[#allocation2 + $0x68] sm:$0xff] %vm222, 0.0
      %238 = vst.msk [vmem:[#allocation2 + $0x70] sm:$0x3] %vm225, 0.0
      %239 = vst.msk [vmem:[#allocation2 + $0x78] sm:$0xff] %vm222, 0.0
      %240 = vst.msk [vmem:[#allocation2 + $0x80] sm:$0xff] %vm222, 0.0
      %241 = vst.msk [vmem:[#allocation2 + $0x88] sm:$0x3] %vm225, 0.0
      %242 = vst.msk [vmem:[#allocation2 + $0x90] sm:$0xff] %vm222, 0.0
      %243 = vst.msk [vmem:[#allocation2 + $0x98] sm:$0xff] %vm222, 0.0
      %244 = vst.msk [vmem:[#allocation2 + $0xa0] sm:$0x3] %vm225, 0.0
      %245 = vst.msk [vmem:[#allocation2 + $0xa8] sm:$0xff] %vm222, 0.0
      %246 = vst.msk [vmem:[#allocation2 + $0xb0] sm:$0xff] %vm222, 0.0
      %247 = vst.msk [vmem:[#allocation2 + $0xb8] sm:$0x3] %vm225, 0.0
      %248 = vst.msk [vmem:[#allocation2 + $0xc0] sm:$0xff] %vm222, 0.0
      %249 = vst.msk [vmem:[#allocation2 + $0xc8] sm:$0xff] %vm222, 0.0
      %250 = vst.msk [vmem:[#allocation2 + $0xd0] sm:$0x3] %vm225, 0.0
      %251 = vst.msk [vmem:[#allocation2 + $0xd8] sm:$0xff] %vm222, 0.0
      %252 = vst.msk [vmem:[#allocation2 + $0xe0] sm:$0xff] %vm222, 0.0
      %253 = vst.msk [vmem:[#allocation2 + $0xe8] sm:$0x3] %vm225, 0.0
      %254 = vst.msk [vmem:[#allocation2 + $0xf0] sm:$0xff] %vm222, 0.0
      %255 = vst.msk [vmem:[#allocation2 + $0xf8] sm:$0xff] %vm222, 0.0
      %256 = vst.msk [vmem:[#allocation2 + $0x100] sm:$0x3] %vm225, 0.0
      %257 = vst.msk [vmem:[#allocation2 + $0x108] sm:$0xff] %vm222, 0.0
      %258 = vst.msk [vmem:[#allocation2 + $0x110] sm:$0xff] %vm222, 0.0
      %259 = vst.msk [vmem:[#allocation2 + $0x118] sm:$0x3] %vm225, 0.0
      %260 = vst.msk [vmem:[#allocation2 + $0x120] sm:$0xff] %vm222, 0.0
      %261 = vst.msk [vmem:[#allocation2 + $0x128] sm:$0xff] %vm222, 0.0
      %262 = vst.msk [vmem:[#allocation2 + $0x130] sm:$0x3] %vm225, 0.0
      %263 = vst.msk [vmem:[#allocation2 + $0x138] sm:$0xff] %vm222, 0.0
      %264 = vst.msk [vmem:[#allocation2 + $0x140] sm:$0xff] %vm222, 0.0
      %265 = vst.msk [vmem:[#allocation2 + $0x148] sm:$0x3] %vm225, 0.0
      %266 = vst.msk [vmem:[#allocation2 + $0x150] sm:$0xff] %vm222, 0.0
      %267 = vst.msk [vmem:[#allocation2 + $0x158] sm:$0xff] %vm222, 0.0
      %268 = vst.msk [vmem:[#allocation2 + $0x160] sm:$0x3] %vm225, 0.0
      %269 = vst.msk [vmem:[#allocation2 + $0x168] sm:$0xff] %vm222, 0.0
      %270 = vst.msk [vmem:[#allocation2 + $0x170] sm:$0xff] %vm222, 0.0
      %271 = vst.msk [vmem:[#allocation2 + $0x178] sm:$0x3] %vm225, 0.0
      %272 = vst.msk [vmem:[#allocation2 + $0x180] sm:$0xff] %vm222, 0.0
      %273 = vst.msk [vmem:[#allocation2 + $0x188] sm:$0xff] %vm222, 0.0
      %274 = vst.msk [vmem:[#allocation2 + $0x190] sm:$0x3] %vm225, 0.0
      %275 = vst.msk [vmem:[#allocation2 + $0x198] sm:$0xff] %vm222, 0.0
      %276 = vst.msk [vmem:[#allocation2 + $0x1a0] sm:$0xff] %vm222, 0.0
      %277 = vst.msk [vmem:[#allocation2 + $0x1a8] sm:$0x3] %vm225, 0.0
      %v278 = vld [vmem:[%s206] sm:$0xff]
      %v279 = vld [vmem:[%s206 + $0x8] sm:$0xff]
      %v280 = vld [vmem:[%s206 + $0x10] sm:$0xff]
      %v281 = vld [vmem:[%s206 + $0x18] sm:$0xff]
      %v282 = vld [vmem:[%s206 + $0x20] sm:$0xff]
      %v283 = vld [vmem:[%s206 + $0x28] sm:$0xff]
      %v284 = vld [vmem:[%s206 + $0x30] sm:$0xff]
      %v285 = vld [vmem:[%s206 + $0x38] sm:$0xff]
      %v286 = vld [vmem:[%s206 + $0x40] sm:$0xff]
      %v287 = vld [vmem:[%s206 + $0x48] sm:$0xff]
      %v288 = vld [vmem:[%s206 + $0x50] sm:$0xff]
      %v289 = vld [vmem:[%s206 + $0x58] sm:$0xff]
      %v290 = vld [vmem:[%s206 + $0x60] sm:$0xff]
      %v291 = vld [vmem:[%s206 + $0x68] sm:$0xff]
      %v292 = vld [vmem:[%s206 + $0x70] sm:$0xff]
      %v293 = vld [vmem:[%s206 + $0x78] sm:$0xff]
      %v294 = vld [vmem:[%s206 + $0x80] sm:$0xff]
      %v295 = vld [vmem:[%s206 + $0x88] sm:$0xff]
      %v296 = vld [vmem:[%s206 + $0x90] sm:$0xff]
      %v297 = vld [vmem:[%s206 + $0x98] sm:$0xff]
      %v298 = vld [vmem:[%s206 + $0xa0] sm:$0xff]
      %v299 = vld [vmem:[%s206 + $0xa8] sm:$0xff]
      %v300 = vld [vmem:[%s206 + $0xb0] sm:$0xff]
      %v301 = vld [vmem:[%s206 + $0xb8] sm:$0xff]
      %v302 = vld [vmem:[%s206 + $0xc0] sm:$0xff]
      %v303 = vld [vmem:[%s206 + $0xc8] sm:$0xff]
      %v304 = vld [vmem:[%s206 + $0xd0] sm:$0xff]
      %v305 = vld [vmem:[%s206 + $0xd8] sm:$0xff]
      %v306 = vld [vmem:[%s206 + $0xe0] sm:$0xff]
      %v307 = vld [vmem:[%s206 + $0xe8] sm:$0xff]
      %v308 = vld [vmem:[%s206 + $0xf0] sm:$0xff]
      %v309 = vld [vmem:[%s206 + $0xf8] sm:$0xff]
      %s310 = scalar_lea.vmem [#allocation2], 24
      %311 = vst.msk [vmem:[%s310 + $0x1] sm:$0xff] %vm222, %v278
      %312 = vst.msk [vmem:[%s310 + $0x9] sm:$0xff] %vm222, %v279
      %313 = vst.msk [vmem:[%s310 + $0x19] sm:$0xff] %vm222, %v280
      %314 = vst.msk [vmem:[%s310 + $0x21] sm:$0xff] %vm222, %v281
      %315 = vst.msk [vmem:[%s310 + $0x31] sm:$0xff] %vm222, %v282
      %316 = vst.msk [vmem:[%s310 + $0x39] sm:$0xff] %vm222, %v283
      %317 = vst.msk [vmem:[%s310 + $0x49] sm:$0xff] %vm222, %v284
      %318 = vst.msk [vmem:[%s310 + $0x51] sm:$0xff] %vm222, %v285
      %319 = vst.msk [vmem:[%s310 + $0x61] sm:$0xff] %vm222, %v286
      %320 = vst.msk [vmem:[%s310 + $0x69] sm:$0xff] %vm222, %v287
      %321 = vst.msk [vmem:[%s310 + $0x79] sm:$0xff] %vm222, %v288
      %322 = vst.msk [vmem:[%s310 + $0x81] sm:$0xff] %vm222, %v289
      %323 = vst.msk [vmem:[%s310 + $0x91] sm:$0xff] %vm222, %v290
      %324 = vst.msk [vmem:[%s310 + $0x99] sm:$0xff] %vm222, %v291
      %325 = vst.msk [vmem:[%s310 + $0xa9] sm:$0xff] %vm222, %v292
      %326 = vst.msk [vmem:[%s310 + $0xb1] sm:$0xff] %vm222, %v293
      %327 = vst.msk [vmem:[%s310 + $0xc1] sm:$0xff] %vm222, %v294
      %328 = vst.msk [vmem:[%s310 + $0xc9] sm:$0xff] %vm222, %v295
      %329 = vst.msk [vmem:[%s310 + $0xd9] sm:$0xff] %vm222, %v296
      %330 = vst.msk [vmem:[%s310 + $0xe1] sm:$0xff] %vm222, %v297
      %331 = vst.msk [vmem:[%s310 + $0xf1] sm:$0xff] %vm222, %v298
      %332 = vst.msk [vmem:[%s310 + $0xf9] sm:$0xff] %vm222, %v299
      %333 = vst.msk [vmem:[%s310 + $0x109] sm:$0xff] %vm222, %v300
      %334 = vst.msk [vmem:[%s310 + $0x111] sm:$0xff] %vm222, %v301
      %335 = vst.msk [vmem:[%s310 + $0x121] sm:$0xff] %vm222, %v302
      %336 = vst.msk [vmem:[%s310 + $0x129] sm:$0xff] %vm222, %v303
      %337 = vst.msk [vmem:[%s310 + $0x139] sm:$0xff] %vm222, %v304
      %338 = vst.msk [vmem:[%s310 + $0x141] sm:$0xff] %vm222, %v305
      %339 = vst.msk [vmem:[%s310 + $0x151] sm:$0xff] %vm222, %v306
      %340 = vst.msk [vmem:[%s310 + $0x159] sm:$0xff] %vm222, %v307
      %341 = vst.msk [vmem:[%s310 + $0x169] sm:$0xff] %vm222, %v308
      %342 = vst.msk [vmem:[%s310 + $0x171] sm:$0xff] %vm222, %v309
      %v343 = vld [vmem:[#allocation2] sm:$0xff]
      %v344 = vld [vmem:[#allocation2 + $0x8] sm:$0xff]
      %v345 = vld [vmem:[#allocation2 + $0x18] sm:$0xff]
      %v346 = vld [vmem:[#allocation2 + $0x20] sm:$0xff]
      %v347 = vld [vmem:[#allocation2 + $0x30] sm:$0xff]
      %v348 = vld [vmem:[#allocation2 + $0x38] sm:$0xff]
      %v349 = vld [vmem:[#allocation2 + $0x48] sm:$0xff]
      %v350 = vld [vmem:[#allocation2 + $0x50] sm:$0xff]
      %v351 = vld [vmem:[#allocation2 + $0x60] sm:$0xff]
      %v352 = vld [vmem:[#allocation2 + $0x68] sm:$0xff]
      %v353 = vld [vmem:[#allocation2 + $0x78] sm:$0xff]
      %v354 = vld [vmem:[#allocation2 + $0x80] sm:$0xff]
      %v355 = vld [vmem:[#allocation2 + $0x90] sm:$0xff]
      %v356 = vld [vmem:[#allocation2 + $0x98] sm:$0xff]
      %v357 = vld [vmem:[#allocation2 + $0xa8] sm:$0xff]
      %v358 = vld [vmem:[#allocation2 + $0xb0] sm:$0xff]
      %v359 = vld [vmem:[#allocation2 + $0xc0] sm:$0xff]
      %v360 = vld [vmem:[#allocation2 + $0xc8] sm:$0xff]
      %v361 = vld [vmem:[#allocation2 + $0xd8] sm:$0xff]
      %v362 = vld [vmem:[#allocation2 + $0xe0] sm:$0xff]
      %v363 = vld [vmem:[#allocation2 + $0xf0] sm:$0xff]
      %v364 = vld [vmem:[#allocation2 + $0xf8] sm:$0xff]
      %v365 = vld [vmem:[#allocation2 + $0x108] sm:$0xff]
      %v366 = vld [vmem:[#allocation2 + $0x110] sm:$0xff]
      %v367 = vld [vmem:[#allocation2 + $0x120] sm:$0xff]
      %v368 = vld [vmem:[#allocation2 + $0x128] sm:$0xff]
      %v369 = vld [vmem:[#allocation2 + $0x138] sm:$0xff]
      %v370 = vld [vmem:[#allocation2 + $0x140] sm:$0xff]
      %v371 = vld [vmem:[#allocation2 + $0x150] sm:$0xff]
      %v372 = vld [vmem:[#allocation2 + $0x158] sm:$0xff]
      %v373 = vld [vmem:[#allocation2 + $0x168] sm:$0xff]
      %v374 = vld [vmem:[#allocation2 + $0x170] sm:$0xff]
      %v375 = vld [vmem:[#allocation2 + $0x1] sm:$0xff]
      %v376 = vld [vmem:[#allocation2 + $0x9] sm:$0xff]
      %v377 = vld [vmem:[#allocation2 + $0x19] sm:$0xff]
      %v378 = vld [vmem:[#allocation2 + $0x21] sm:$0xff]
      %v379 = vld [vmem:[#allocation2 + $0x31] sm:$0xff]
      %v380 = vld [vmem:[#allocation2 + $0x39] sm:$0xff]
      %v381 = vld [vmem:[#allocation2 + $0x49] sm:$0xff]
      %v382 = vld [vmem:[#allocation2 + $0x51] sm:$0xff]
      %v383 = vld [vmem:[#allocation2 + $0x61] sm:$0xff]
      %v384 = vld [vmem:[#allocation2 + $0x69] sm:$0xff]
      %v385 = vld [vmem:[#allocation2 + $0x79] sm:$0xff]
      %v386 = vld [vmem:[#allocation2 + $0x81] sm:$0xff]
      %v387 = vld [vmem:[#allocation2 + $0x91] sm:$0xff]
      %v388 = vld [vmem:[#allocation2 + $0x99] sm:$0xff]
      %v389 = vld [vmem:[#allocation2 + $0xa9] sm:$0xff]
      %v390 = vld [vmem:[#allocation2 + $0xb1] sm:$0xff]
      %v391 = vld [vmem:[#allocation2 + $0xc1] sm:$0xff]
      %v392 = vld [vmem:[#allocation2 + $0xc9] sm:$0xff]
      %v393 = vld [vmem:[#allocation2 + $0xd9] sm:$0xff]
      %v394 = vld [vmem:[#allocation2 + $0xe1] sm:$0xff]
      %v395 = vld [vmem:[#allocation2 + $0xf1] sm:$0xff]
      %v396 = vld [vmem:[#allocation2 + $0xf9] sm:$0xff]
      %v397 = vld [vmem:[#allocation2 + $0x109] sm:$0xff]
      %v398 = vld [vmem:[#allocation2 + $0x111] sm:$0xff]
      %v399 = vld [vmem:[#allocation2 + $0x121] sm:$0xff]
      %v400 = vld [vmem:[#allocation2 + $0x129] sm:$0xff]
      %v401 = vld [vmem:[#allocation2 + $0x139] sm:$0xff]
      %v402 = vld [vmem:[#allocation2 + $0x141] sm:$0xff]
      %v403 = vld [vmem:[#allocation2 + $0x151] sm:$0xff]
      %v404 = vld [vmem:[#allocation2 + $0x159] sm:$0xff]
      %v405 = vld [vmem:[#allocation2 + $0x169] sm:$0xff]
      %v406 = vld [vmem:[#allocation2 + $0x171] sm:$0xff]
      %v407 = vld [vmem:[#allocation2 + $0x2] sm:$0xff]
      %v408 = vld [vmem:[#allocation2 + $0xa] sm:$0xff]
      %v409 = vld [vmem:[#allocation2 + $0x1a] sm:$0xff]
      %v410 = vld [vmem:[#allocation2 + $0x22] sm:$0xff]
      %v411 = vld [vmem:[#allocation2 + $0x32] sm:$0xff]
      %v412 = vld [vmem:[#allocation2 + $0x3a] sm:$0xff]
      %v413 = vld [vmem:[#allocation2 + $0x4a] sm:$0xff]
      %v414 = vld [vmem:[#allocation2 + $0x52] sm:$0xff]
      %v415 = vld [vmem:[#allocation2 + $0x62] sm:$0xff]
      %v416 = vld [vmem:[#allocation2 + $0x6a] sm:$0xff]
      %v417 = vld [vmem:[#allocation2 + $0x7a] sm:$0xff]
      %v418 = vld [vmem:[#allocation2 + $0x82] sm:$0xff]
      %v419 = vld [vmem:[#allocation2 + $0x92] sm:$0xff]
      %v420 = vld [vmem:[#allocation2 + $0x9a] sm:$0xff]
      %v421 = vld [vmem:[#allocation2 + $0xaa] sm:$0xff]
      %v422 = vld [vmem:[#allocation2 + $0xb2] sm:$0xff]
      %v423 = vld [vmem:[#allocation2 + $0xc2] sm:$0xff]
      %v424 = vld [vmem:[#allocation2 + $0xca] sm:$0xff]
      %v425 = vld [vmem:[#allocation2 + $0xda] sm:$0xff]
      %v426 = vld [vmem:[#allocation2 + $0xe2] sm:$0xff]
      %v427 = vld [vmem:[#allocation2 + $0xf2] sm:$0xff]
      %v428 = vld [vmem:[#allocation2 + $0xfa] sm:$0xff]
      %v429 = vld [vmem:[#allocation2 + $0x10a] sm:$0xff]
      %v430 = vld [vmem:[#allocation2 + $0x112] sm:$0xff]
      %v431 = vld [vmem:[#allocation2 + $0x122] sm:$0xff]
      %v432 = vld [vmem:[#allocation2 + $0x12a] sm:$0xff]
      %v433 = vld [vmem:[#allocation2 + $0x13a] sm:$0xff]
      %v434 = vld [vmem:[#allocation2 + $0x142] sm:$0xff]
      %v435 = vld [vmem:[#allocation2 + $0x152] sm:$0xff]
      %v436 = vld [vmem:[#allocation2 + $0x15a] sm:$0xff]
      %v437 = vld [vmem:[#allocation2 + $0x16a] sm:$0xff]
      %v438 = vld [vmem:[#allocation2 + $0x172] sm:$0xff]
      %v439 = vld [vmem:[%s310] sm:$0xff]
      %v440 = vld [vmem:[%s310 + $0x8] sm:$0xff]
      %v441 = vld [vmem:[%s310 + $0x18] sm:$0xff]
      %v442 = vld [vmem:[%s310 + $0x20] sm:$0xff]
      %v443 = vld [vmem:[%s310 + $0x30] sm:$0xff]
      %v444 = vld [vmem:[%s310 + $0x38] sm:$0xff]
      %v445 = vld [vmem:[%s310 + $0x48] sm:$0xff]
      %v446 = vld [vmem:[%s310 + $0x50] sm:$0xff]
      %v447 = vld [vmem:[%s310 + $0x60] sm:$0xff]
      %v448 = vld [vmem:[%s310 + $0x68] sm:$0xff]
      %v449 = vld [vmem:[%s310 + $0x78] sm:$0xff]
      %v450 = vld [vmem:[%s310 + $0x80] sm:$0xff]
      %v451 = vld [vmem:[%s310 + $0x90] sm:$0xff]
      %v452 = vld [vmem:[%s310 + $0x98] sm:$0xff]
      %v453 = vld [vmem:[%s310 + $0xa8] sm:$0xff]
      %v454 = vld [vmem:[%s310 + $0xb0] sm:$0xff]
      %v455 = vld [vmem:[%s310 + $0xc0] sm:$0xff]
      %v456 = vld [vmem:[%s310 + $0xc8] sm:$0xff]
      %v457 = vld [vmem:[%s310 + $0xd8] sm:$0xff]
      %v458 = vld [vmem:[%s310 + $0xe0] sm:$0xff]
      %v459 = vld [vmem:[%s310 + $0xf0] sm:$0xff]
      %v460 = vld [vmem:[%s310 + $0xf8] sm:$0xff]
      %v461 = vld [vmem:[%s310 + $0x108] sm:$0xff]
      %v462 = vld [vmem:[%s310 + $0x110] sm:$0xff]
      %v463 = vld [vmem:[%s310 + $0x120] sm:$0xff]
      %v464 = vld [vmem:[%s310 + $0x128] sm:$0xff]
      %v465 = vld [vmem:[%s310 + $0x138] sm:$0xff]
      %v466 = vld [vmem:[%s310 + $0x140] sm:$0xff]
      %v467 = vld [vmem:[%s310 + $0x150] sm:$0xff]
      %v468 = vld [vmem:[%s310 + $0x158] sm:$0xff]
      %v469 = vld [vmem:[%s310 + $0x168] sm:$0xff]
      %v470 = vld [vmem:[%s310 + $0x170] sm:$0xff]
      %v471 = vld [vmem:[%s310 + $0x1] sm:$0xff]
      %v472 = vld [vmem:[%s310 + $0x9] sm:$0xff]
      %v473 = vld [vmem:[%s310 + $0x19] sm:$0xff]
      %v474 = vld [vmem:[%s310 + $0x21] sm:$0xff]
      %v475 = vld [vmem:[%s310 + $0x31] sm:$0xff]
      %v476 = vld [vmem:[%s310 + $0x39] sm:$0xff]
      %v477 = vld [vmem:[%s310 + $0x49] sm:$0xff]
      %v478 = vld [vmem:[%s310 + $0x51] sm:$0xff]
      %v479 = vld [vmem:[%s310 + $0x61] sm:$0xff]
      %v480 = vld [vmem:[%s310 + $0x69] sm:$0xff]
      %v481 = vld [vmem:[%s310 + $0x79] sm:$0xff]
      %v482 = vld [vmem:[%s310 + $0x81] sm:$0xff]
      %v483 = vld [vmem:[%s310 + $0x91] sm:$0xff]
      %v484 = vld [vmem:[%s310 + $0x99] sm:$0xff]
      %v485 = vld [vmem:[%s310 + $0xa9] sm:$0xff]
      %v486 = vld [vmem:[%s310 + $0xb1] sm:$0xff]
      %v487 = vld [vmem:[%s310 + $0xc1] sm:$0xff]
      %v488 = vld [vmem:[%s310 + $0xc9] sm:$0xff]
      %v489 = vld [vmem:[%s310 + $0xd9] sm:$0xff]
      %v490 = vld [vmem:[%s310 + $0xe1] sm:$0xff]
      %v491 = vld [vmem:[%s310 + $0xf1] sm:$0xff]
      %v492 = vld [vmem:[%s310 + $0xf9] sm:$0xff]
      %v493 = vld [vmem:[%s310 + $0x109] sm:$0xff]
      %v494 = vld [vmem:[%s310 + $0x111] sm:$0xff]
      %v495 = vld [vmem:[%s310 + $0x121] sm:$0xff]
      %v496 = vld [vmem:[%s310 + $0x129] sm:$0xff]
      %v497 = vld [vmem:[%s310 + $0x139] sm:$0xff]
      %v498 = vld [vmem:[%s310 + $0x141] sm:$0xff]
      %v499 = vld [vmem:[%s310 + $0x151] sm:$0xff]
      %v500 = vld [vmem:[%s310 + $0x159] sm:$0xff]
      %v501 = vld [vmem:[%s310 + $0x169] sm:$0xff]
      %v502 = vld [vmem:[%s310 + $0x171] sm:$0xff]
      %v503 = vld [vmem:[%s310 + $0x2] sm:$0xff]
      %v504 = vld [vmem:[%s310 + $0xa] sm:$0xff]
      %v505 = vld [vmem:[%s310 + $0x1a] sm:$0xff]
      %v506 = vld [vmem:[%s310 + $0x22] sm:$0xff]
      %v507 = vld [vmem:[%s310 + $0x32] sm:$0xff]
      %v508 = vld [vmem:[%s310 + $0x3a] sm:$0xff]
      %v509 = vld [vmem:[%s310 + $0x4a] sm:$0xff]
      %v510 = vld [vmem:[%s310 + $0x52] sm:$0xff]
      %v511 = vld [vmem:[%s310 + $0x62] sm:$0xff]
      %v512 = vld [vmem:[%s310 + $0x6a] sm:$0xff]
      %v513 = vld [vmem:[%s310 + $0x7a] sm:$0xff]
      %v514 = vld [vmem:[%s310 + $0x82] sm:$0xff]
      %v515 = vld [vmem:[%s310 + $0x92] sm:$0xff]
      %v516 = vld [vmem:[%s310 + $0x9a] sm:$0xff]
      %v517 = vld [vmem:[%s310 + $0xaa] sm:$0xff]
      %v518 = vld [vmem:[%s310 + $0xb2] sm:$0xff]
      %v519 = vld [vmem:[%s310 + $0xc2] sm:$0xff]
      %v520 = vld [vmem:[%s310 + $0xca] sm:$0xff]
      %v521 = vld [vmem:[%s310 + $0xda] sm:$0xff]
      %v522 = vld [vmem:[%s310 + $0xe2] sm:$0xff]
      %v523 = vld [vmem:[%s310 + $0xf2] sm:$0xff]
      %v524 = vld [vmem:[%s310 + $0xfa] sm:$0xff]
      %v525 = vld [vmem:[%s310 + $0x10a] sm:$0xff]
      %v526 = vld [vmem:[%s310 + $0x112] sm:$0xff]
      %v527 = vld [vmem:[%s310 + $0x122] sm:$0xff]
      %v528 = vld [vmem:[%s310 + $0x12a] sm:$0xff]
      %v529 = vld [vmem:[%s310 + $0x13a] sm:$0xff]
      %v530 = vld [vmem:[%s310 + $0x142] sm:$0xff]
      %v531 = vld [vmem:[%s310 + $0x152] sm:$0xff]
      %v532 = vld [vmem:[%s310 + $0x15a] sm:$0xff]
      %v533 = vld [vmem:[%s310 + $0x16a] sm:$0xff]
      %v534 = vld [vmem:[%s310 + $0x172] sm:$0xff]
      %s535 = scalar_lea.vmem [#allocation2], 48
      %v536 = vld [vmem:[%s535] sm:$0xff]
      %v537 = vld [vmem:[%s535 + $0x8] sm:$0xff]
      %v538 = vld [vmem:[%s535 + $0x18] sm:$0xff]
      %v539 = vld [vmem:[%s535 + $0x20] sm:$0xff]
      %v540 = vld [vmem:[%s535 + $0x30] sm:$0xff]
      %v541 = vld [vmem:[%s535 + $0x38] sm:$0xff]
      %v542 = vld [vmem:[%s535 + $0x48] sm:$0xff]
      %v543 = vld [vmem:[%s535 + $0x50] sm:$0xff]
      %v544 = vld [vmem:[%s535 + $0x60] sm:$0xff]
      %v545 = vld [vmem:[%s535 + $0x68] sm:$0xff]
      %v546 = vld [vmem:[%s535 + $0x78] sm:$0xff]
      %v547 = vld [vmem:[%s535 + $0x80] sm:$0xff]
      %v548 = vld [vmem:[%s535 + $0x90] sm:$0xff]
      %v549 = vld [vmem:[%s535 + $0x98] sm:$0xff]
      %v550 = vld [vmem:[%s535 + $0xa8] sm:$0xff]
      %v551 = vld [vmem:[%s535 + $0xb0] sm:$0xff]
      %v552 = vld [vmem:[%s535 + $0xc0] sm:$0xff]
      %v553 = vld [vmem:[%s535 + $0xc8] sm:$0xff]
      %v554 = vld [vmem:[%s535 + $0xd8] sm:$0xff]
      %v555 = vld [vmem:[%s535 + $0xe0] sm:$0xff]
      %v556 = vld [vmem:[%s535 + $0xf0] sm:$0xff]
      %v557 = vld [vmem:[%s535 + $0xf8] sm:$0xff]
      %v558 = vld [vmem:[%s535 + $0x108] sm:$0xff]
      %v559 = vld [vmem:[%s535 + $0x110] sm:$0xff]
      %v560 = vld [vmem:[%s535 + $0x120] sm:$0xff]
      %v561 = vld [vmem:[%s535 + $0x128] sm:$0xff]
      %v562 = vld [vmem:[%s535 + $0x138] sm:$0xff]
      %v563 = vld [vmem:[%s535 + $0x140] sm:$0xff]
      %v564 = vld [vmem:[%s535 + $0x150] sm:$0xff]
      %v565 = vld [vmem:[%s535 + $0x158] sm:$0xff]
      %v566 = vld [vmem:[%s535 + $0x168] sm:$0xff]
      %v567 = vld [vmem:[%s535 + $0x170] sm:$0xff]
      %v568 = vld [vmem:[%s535 + $0x1] sm:$0xff]
      %v569 = vld [vmem:[%s535 + $0x9] sm:$0xff]
      %v570 = vld [vmem:[%s535 + $0x19] sm:$0xff]
      %v571 = vld [vmem:[%s535 + $0x21] sm:$0xff]
      %v572 = vld [vmem:[%s535 + $0x31] sm:$0xff]
      %v573 = vld [vmem:[%s535 + $0x39] sm:$0xff]
      %v574 = vld [vmem:[%s535 + $0x49] sm:$0xff]
      %v575 = vld [vmem:[%s535 + $0x51] sm:$0xff]
      %v576 = vld [vmem:[%s535 + $0x61] sm:$0xff]
      %v577 = vld [vmem:[%s535 + $0x69] sm:$0xff]
      %v578 = vld [vmem:[%s535 + $0x79] sm:$0xff]
      %v579 = vld [vmem:[%s535 + $0x81] sm:$0xff]
      %v580 = vld [vmem:[%s535 + $0x91] sm:$0xff]
      %v581 = vld [vmem:[%s535 + $0x99] sm:$0xff]
      %v582 = vld [vmem:[%s535 + $0xa9] sm:$0xff]
      %v583 = vld [vmem:[%s535 + $0xb1] sm:$0xff]
      %v584 = vld [vmem:[%s535 + $0xc1] sm:$0xff]
      %v585 = vld [vmem:[%s535 + $0xc9] sm:$0xff]
      %v586 = vld [vmem:[%s535 + $0xd9] sm:$0xff]
      %v587 = vld [vmem:[%s535 + $0xe1] sm:$0xff]
      %v588 = vld [vmem:[%s535 + $0xf1] sm:$0xff]
      %v589 = vld [vmem:[%s535 + $0xf9] sm:$0xff]
      %v590 = vld [vmem:[%s535 + $0x109] sm:$0xff]
      %v591 = vld [vmem:[%s535 + $0x111] sm:$0xff]
      %v592 = vld [vmem:[%s535 + $0x121] sm:$0xff]
      %v593 = vld [vmem:[%s535 + $0x129] sm:$0xff]
      %v594 = vld [vmem:[%s535 + $0x139] sm:$0xff]
      %v595 = vld [vmem:[%s535 + $0x141] sm:$0xff]
      %v596 = vld [vmem:[%s535 + $0x151] sm:$0xff]
      %v597 = vld [vmem:[%s535 + $0x159] sm:$0xff]
      %v598 = vld [vmem:[%s535 + $0x169] sm:$0xff]
      %v599 = vld [vmem:[%s535 + $0x171] sm:$0xff]
      %v600 = vld [vmem:[%s535 + $0x2] sm:$0xff]
      %v601 = vld [vmem:[%s535 + $0xa] sm:$0xff]
      %v602 = vld [vmem:[%s535 + $0x1a] sm:$0xff]
      %v603 = vld [vmem:[%s535 + $0x22] sm:$0xff]
      %v604 = vld [vmem:[%s535 + $0x32] sm:$0xff]
      %v605 = vld [vmem:[%s535 + $0x3a] sm:$0xff]
      %v606 = vld [vmem:[%s535 + $0x4a] sm:$0xff]
      %v607 = vld [vmem:[%s535 + $0x52] sm:$0xff]
      %v608 = vld [vmem:[%s535 + $0x62] sm:$0xff]
      %v609 = vld [vmem:[%s535 + $0x6a] sm:$0xff]
      %v610 = vld [vmem:[%s535 + $0x7a] sm:$0xff]
      %v611 = vld [vmem:[%s535 + $0x82] sm:$0xff]
      %v612 = vld [vmem:[%s535 + $0x92] sm:$0xff]
      %v613 = vld [vmem:[%s535 + $0x9a] sm:$0xff]
      %v614 = vld [vmem:[%s535 + $0xaa] sm:$0xff]
      %v615 = vld [vmem:[%s535 + $0xb2] sm:$0xff]
      %v616 = vld [vmem:[%s535 + $0xc2] sm:$0xff]
      %v617 = vld [vmem:[%s535 + $0xca] sm:$0xff]
      %v618 = vld [vmem:[%s535 + $0xda] sm:$0xff]
      %v619 = vld [vmem:[%s535 + $0xe2] sm:$0xff]
      %v620 = vld [vmem:[%s535 + $0xf2] sm:$0xff]
      %v621 = vld [vmem:[%s535 + $0xfa] sm:$0xff]
      %v622 = vld [vmem:[%s535 + $0x10a] sm:$0xff]
      %v623 = vld [vmem:[%s535 + $0x112] sm:$0xff]
      %v624 = vld [vmem:[%s535 + $0x122] sm:$0xff]
      %v625 = vld [vmem:[%s535 + $0x12a] sm:$0xff]
      %v626 = vld [vmem:[%s535 + $0x13a] sm:$0xff]
      %v627 = vld [vmem:[%s535 + $0x142] sm:$0xff]
      %v628 = vld [vmem:[%s535 + $0x152] sm:$0xff]
      %v629 = vld [vmem:[%s535 + $0x15a] sm:$0xff]
      %v630 = vld [vmem:[%s535 + $0x16a] sm:$0xff]
      %v631 = vld [vmem:[%s535 + $0x172] sm:$0xff]
      %664 = vrot.lane.b32.xlu0 %v375, 4
      %v665 = vpop.permute.xlu0 %664
      %666 = vrot.lane.b32.xlu0 %v376, 4
      %v667 = vpop.permute.xlu0 %666
      %668 = vrot.lane.b32.xlu0 %v377, 4
      %v669 = vpop.permute.xlu0 %668
      %670 = vrot.lane.b32.xlu0 %v378, 4
      %v671 = vpop.permute.xlu0 %670
      %672 = vrot.lane.b32.xlu0 %v379, 4
      %v673 = vpop.permute.xlu0 %672
      %674 = vrot.lane.b32.xlu0 %v380, 4
      %v675 = vpop.permute.xlu0 %674
      %676 = vrot.lane.b32.xlu0 %v381, 4
      %v677 = vpop.permute.xlu0 %676
      %678 = vrot.lane.b32.xlu0 %v382, 4
      %v679 = vpop.permute.xlu0 %678
      %680 = vrot.lane.b32.xlu0 %v383, 4
      %v681 = vpop.permute.xlu0 %680
      %682 = vrot.lane.b32.xlu0 %v384, 4
      %v683 = vpop.permute.xlu0 %682
      %684 = vrot.lane.b32.xlu0 %v385, 4
      %v685 = vpop.permute.xlu0 %684
      %686 = vrot.lane.b32.xlu0 %v386, 4
      %v687 = vpop.permute.xlu0 %686
      %688 = vrot.lane.b32.xlu0 %v387, 4
      %v689 = vpop.permute.xlu0 %688
      %690 = vrot.lane.b32.xlu0 %v388, 4
      %v691 = vpop.permute.xlu0 %690
      %692 = vrot.lane.b32.xlu0 %v389, 4
      %v693 = vpop.permute.xlu0 %692
      %694 = vrot.lane.b32.xlu0 %v390, 4
      %v695 = vpop.permute.xlu0 %694
      %696 = vrot.lane.b32.xlu0 %v391, 4
      %v697 = vpop.permute.xlu0 %696
      %698 = vrot.lane.b32.xlu0 %v392, 4
      %v699 = vpop.permute.xlu0 %698
      %700 = vrot.lane.b32.xlu0 %v393, 4
      %v701 = vpop.permute.xlu0 %700
      %702 = vrot.lane.b32.xlu0 %v394, 4
      %v703 = vpop.permute.xlu0 %702
      %704 = vrot.lane.b32.xlu0 %v395, 4
      %v705 = vpop.permute.xlu0 %704
      %706 = vrot.lane.b32.xlu0 %v396, 4
      %v707 = vpop.permute.xlu0 %706
      %708 = vrot.lane.b32.xlu0 %v397, 4
      %v709 = vpop.permute.xlu0 %708
      %710 = vrot.lane.b32.xlu0 %v398, 4
      %v711 = vpop.permute.xlu0 %710
      %712 = vrot.lane.b32.xlu0 %v399, 4
      %v713 = vpop.permute.xlu0 %712
      %714 = vrot.lane.b32.xlu0 %v400, 4
      %v715 = vpop.permute.xlu0 %714
      %716 = vrot.lane.b32.xlu0 %v401, 4
      %v717 = vpop.permute.xlu0 %716
      %718 = vrot.lane.b32.xlu0 %v402, 4
      %v719 = vpop.permute.xlu0 %718
      %720 = vrot.lane.b32.xlu0 %v403, 4
      %v721 = vpop.permute.xlu0 %720
      %722 = vrot.lane.b32.xlu0 %v404, 4
      %v723 = vpop.permute.xlu0 %722
      %724 = vrot.lane.b32.xlu0 %v405, 4
      %v725 = vpop.permute.xlu0 %724
      %726 = vrot.lane.b32.xlu0 %v406, 4
      %v727 = vpop.permute.xlu0 %726
      %792 = vrot.lane.b32.xlu0 %v407, 8
      %v793 = vpop.permute.xlu0 %792
      %794 = vrot.lane.b32.xlu0 %v408, 8
      %v795 = vpop.permute.xlu0 %794
      %796 = vrot.lane.b32.xlu0 %v409, 8
      %v797 = vpop.permute.xlu0 %796
      %798 = vrot.lane.b32.xlu0 %v410, 8
      %v799 = vpop.permute.xlu0 %798
      %800 = vrot.lane.b32.xlu0 %v411, 8
      %v801 = vpop.permute.xlu0 %800
      %802 = vrot.lane.b32.xlu0 %v412, 8
      %v803 = vpop.permute.xlu0 %802
      %804 = vrot.lane.b32.xlu0 %v413, 8
      %v805 = vpop.permute.xlu0 %804
      %806 = vrot.lane.b32.xlu0 %v414, 8
      %v807 = vpop.permute.xlu0 %806
      %808 = vrot.lane.b32.xlu0 %v415, 8
      %v809 = vpop.permute.xlu0 %808
      %810 = vrot.lane.b32.xlu0 %v416, 8
      %v811 = vpop.permute.xlu0 %810
      %812 = vrot.lane.b32.xlu0 %v417, 8
      %v813 = vpop.permute.xlu0 %812
      %814 = vrot.lane.b32.xlu0 %v418, 8
      %v815 = vpop.permute.xlu0 %814
      %816 = vrot.lane.b32.xlu0 %v419, 8
      %v817 = vpop.permute.xlu0 %816
      %818 = vrot.lane.b32.xlu0 %v420, 8
      %v819 = vpop.permute.xlu0 %818
      %820 = vrot.lane.b32.xlu0 %v421, 8
      %v821 = vpop.permute.xlu0 %820
      %822 = vrot.lane.b32.xlu0 %v422, 8
      %v823 = vpop.permute.xlu0 %822
      %824 = vrot.lane.b32.xlu0 %v423, 8
      %v825 = vpop.permute.xlu0 %824
      %826 = vrot.lane.b32.xlu0 %v424, 8
      %v827 = vpop.permute.xlu0 %826
      %828 = vrot.lane.b32.xlu0 %v425, 8
      %v829 = vpop.permute.xlu0 %828
      %830 = vrot.lane.b32.xlu0 %v426, 8
      %v831 = vpop.permute.xlu0 %830
      %832 = vrot.lane.b32.xlu0 %v427, 8
      %v833 = vpop.permute.xlu0 %832
      %834 = vrot.lane.b32.xlu0 %v428, 8
      %v835 = vpop.permute.xlu0 %834
      %836 = vrot.lane.b32.xlu0 %v429, 8
      %v837 = vpop.permute.xlu0 %836
      %838 = vrot.lane.b32.xlu0 %v430, 8
      %v839 = vpop.permute.xlu0 %838
      %840 = vrot.lane.b32.xlu0 %v431, 8
      %v841 = vpop.permute.xlu0 %840
      %842 = vrot.lane.b32.xlu0 %v432, 8
      %v843 = vpop.permute.xlu0 %842
      %844 = vrot.lane.b32.xlu0 %v433, 8
      %v845 = vpop.permute.xlu0 %844
      %846 = vrot.lane.b32.xlu0 %v434, 8
      %v847 = vpop.permute.xlu0 %846
      %848 = vrot.lane.b32.xlu0 %v435, 8
      %v849 = vpop.permute.xlu0 %848
      %850 = vrot.lane.b32.xlu0 %v436, 8
      %v851 = vpop.permute.xlu0 %850
      %852 = vrot.lane.b32.xlu0 %v437, 8
      %v853 = vpop.permute.xlu0 %852
      %854 = vrot.lane.b32.xlu0 %v438, 8
      %v855 = vpop.permute.xlu0 %854
      %920 = vrot.lane.b32.xlu0 %v439, 12
      %v921 = vpop.permute.xlu0 %920
      %922 = vrot.lane.b32.xlu0 %v440, 12
      %v923 = vpop.permute.xlu0 %922
      %924 = vrot.lane.b32.xlu0 %v441, 12
      %v925 = vpop.permute.xlu0 %924
      %926 = vrot.lane.b32.xlu0 %v442, 12
      %v927 = vpop.permute.xlu0 %926
      %928 = vrot.lane.b32.xlu0 %v443, 12
      %v929 = vpop.permute.xlu0 %928
      %930 = vrot.lane.b32.xlu0 %v444, 12
      %v931 = vpop.permute.xlu0 %930
      %932 = vrot.lane.b32.xlu0 %v445, 12
      %v933 = vpop.permute.xlu0 %932
      %934 = vrot.lane.b32.xlu0 %v446, 12
      %v935 = vpop.permute.xlu0 %934
      %936 = vrot.lane.b32.xlu0 %v447, 12
      %v937 = vpop.permute.xlu0 %936
      %938 = vrot.lane.b32.xlu0 %v448, 12
      %v939 = vpop.permute.xlu0 %938
      %940 = vrot.lane.b32.xlu0 %v449, 12
      %v941 = vpop.permute.xlu0 %940
      %942 = vrot.lane.b32.xlu0 %v450, 12
      %v943 = vpop.permute.xlu0 %942
      %944 = vrot.lane.b32.xlu0 %v451, 12
      %v945 = vpop.permute.xlu0 %944
      %946 = vrot.lane.b32.xlu0 %v452, 12
      %v947 = vpop.permute.xlu0 %946
      %948 = vrot.lane.b32.xlu0 %v453, 12
      %v949 = vpop.permute.xlu0 %948
      %950 = vrot.lane.b32.xlu0 %v454, 12
      %v951 = vpop.permute.xlu0 %950
      %952 = vrot.lane.b32.xlu0 %v455, 12
      %v953 = vpop.permute.xlu0 %952
      %954 = vrot.lane.b32.xlu0 %v456, 12
      %v955 = vpop.permute.xlu0 %954
      %956 = vrot.lane.b32.xlu0 %v457, 12
      %v957 = vpop.permute.xlu0 %956
      %958 = vrot.lane.b32.xlu0 %v458, 12
      %v959 = vpop.permute.xlu0 %958
      %960 = vrot.lane.b32.xlu0 %v459, 12
      %v961 = vpop.permute.xlu0 %960
      %962 = vrot.lane.b32.xlu0 %v460, 12
      %v963 = vpop.permute.xlu0 %962
      %964 = vrot.lane.b32.xlu0 %v461, 12
      %v965 = vpop.permute.xlu0 %964
      %966 = vrot.lane.b32.xlu0 %v462, 12
      %v967 = vpop.permute.xlu0 %966
      %968 = vrot.lane.b32.xlu0 %v463, 12
      %v969 = vpop.permute.xlu0 %968
      %970 = vrot.lane.b32.xlu0 %v464, 12
      %v971 = vpop.permute.xlu0 %970
      %972 = vrot.lane.b32.xlu0 %v465, 12
      %v973 = vpop.permute.xlu0 %972
      %974 = vrot.lane.b32.xlu0 %v466, 12
      %v975 = vpop.permute.xlu0 %974
      %976 = vrot.lane.b32.xlu0 %v467, 12
      %v977 = vpop.permute.xlu0 %976
      %978 = vrot.lane.b32.xlu0 %v468, 12
      %v979 = vpop.permute.xlu0 %978
      %980 = vrot.lane.b32.xlu0 %v469, 12
      %v981 = vpop.permute.xlu0 %980
      %982 = vrot.lane.b32.xlu0 %v470, 12
      %v983 = vpop.permute.xlu0 %982
      %1048 = vrot.lane.b32.xlu0 %v471, 16
      %v1049 = vpop.permute.xlu0 %1048
      %1050 = vrot.lane.b32.xlu0 %v472, 16
      %v1051 = vpop.permute.xlu0 %1050
      %1052 = vrot.lane.b32.xlu0 %v473, 16
      %v1053 = vpop.permute.xlu0 %1052
      %1054 = vrot.lane.b32.xlu0 %v474, 16
      %v1055 = vpop.permute.xlu0 %1054
      %1056 = vrot.lane.b32.xlu0 %v475, 16
      %v1057 = vpop.permute.xlu0 %1056
      %1058 = vrot.lane.b32.xlu0 %v476, 16
      %v1059 = vpop.permute.xlu0 %1058
      %1060 = vrot.lane.b32.xlu0 %v477, 16
      %v1061 = vpop.permute.xlu0 %1060
      %1062 = vrot.lane.b32.xlu0 %v478, 16
      %v1063 = vpop.permute.xlu0 %1062
      %1064 = vrot.lane.b32.xlu0 %v479, 16
      %v1065 = vpop.permute.xlu0 %1064
      %1066 = vrot.lane.b32.xlu0 %v480, 16
      %v1067 = vpop.permute.xlu0 %1066
      %1068 = vrot.lane.b32.xlu0 %v481, 16
      %v1069 = vpop.permute.xlu0 %1068
      %1070 = vrot.lane.b32.xlu0 %v482, 16
      %v1071 = vpop.permute.xlu0 %1070
      %1072 = vrot.lane.b32.xlu0 %v483, 16
      %v1073 = vpop.permute.xlu0 %1072
      %1074 = vrot.lane.b32.xlu0 %v484, 16
      %v1075 = vpop.permute.xlu0 %1074
      %1076 = vrot.lane.b32.xlu0 %v485, 16
      %v1077 = vpop.permute.xlu0 %1076
      %1078 = vrot.lane.b32.xlu0 %v486, 16
      %v1079 = vpop.permute.xlu0 %1078
      %1080 = vrot.lane.b32.xlu0 %v487, 16
      %v1081 = vpop.permute.xlu0 %1080
      %1082 = vrot.lane.b32.xlu0 %v488, 16
      %v1083 = vpop.permute.xlu0 %1082
      %1084 = vrot.lane.b32.xlu0 %v489, 16
      %v1085 = vpop.permute.xlu0 %1084
      %1086 = vrot.lane.b32.xlu0 %v490, 16
      %v1087 = vpop.permute.xlu0 %1086
      %1088 = vrot.lane.b32.xlu0 %v491, 16
      %v1089 = vpop.permute.xlu0 %1088
      %1090 = vrot.lane.b32.xlu0 %v492, 16
      %v1091 = vpop.permute.xlu0 %1090
      %1092 = vrot.lane.b32.xlu0 %v493, 16
      %v1093 = vpop.permute.xlu0 %1092
      %1094 = vrot.lane.b32.xlu0 %v494, 16
      %v1095 = vpop.permute.xlu0 %1094
      %1096 = vrot.lane.b32.xlu0 %v495, 16
      %v1097 = vpop.permute.xlu0 %1096
      %1098 = vrot.lane.b32.xlu0 %v496, 16
      %v1099 = vpop.permute.xlu0 %1098
      %1100 = vrot.lane.b32.xlu0 %v497, 16
      %v1101 = vpop.permute.xlu0 %1100
      %1102 = vrot.lane.b32.xlu0 %v498, 16
      %v1103 = vpop.permute.xlu0 %1102
      %1104 = vrot.lane.b32.xlu0 %v499, 16
      %v1105 = vpop.permute.xlu0 %1104
      %1106 = vrot.lane.b32.xlu0 %v500, 16
      %v1107 = vpop.permute.xlu0 %1106
      %1108 = vrot.lane.b32.xlu0 %v501, 16
      %v1109 = vpop.permute.xlu0 %1108
      %1110 = vrot.lane.b32.xlu0 %v502, 16
      %v1111 = vpop.permute.xlu0 %1110
      %1176 = vrot.lane.b32.xlu0 %v503, 20
      %v1177 = vpop.permute.xlu0 %1176
      %1178 = vrot.lane.b32.xlu0 %v504, 20
      %v1179 = vpop.permute.xlu0 %1178
      %1180 = vrot.lane.b32.xlu0 %v505, 20
      %v1181 = vpop.permute.xlu0 %1180
      %1182 = vrot.lane.b32.xlu0 %v506, 20
      %v1183 = vpop.permute.xlu0 %1182
      %1184 = vrot.lane.b32.xlu0 %v507, 20
      %v1185 = vpop.permute.xlu0 %1184
      %1186 = vrot.lane.b32.xlu0 %v508, 20
      %v1187 = vpop.permute.xlu0 %1186
      %1188 = vrot.lane.b32.xlu0 %v509, 20
      %v1189 = vpop.permute.xlu0 %1188
      %1190 = vrot.lane.b32.xlu0 %v510, 20
      %v1191 = vpop.permute.xlu0 %1190
      %1192 = vrot.lane.b32.xlu0 %v511, 20
      %v1193 = vpop.permute.xlu0 %1192
      %1194 = vrot.lane.b32.xlu0 %v512, 20
      %v1195 = vpop.permute.xlu0 %1194
      %1196 = vrot.lane.b32.xlu0 %v513, 20
      %v1197 = vpop.permute.xlu0 %1196
      %1198 = vrot.lane.b32.xlu0 %v514, 20
      %v1199 = vpop.permute.xlu0 %1198
      %1200 = vrot.lane.b32.xlu0 %v515, 20
      %v1201 = vpop.permute.xlu0 %1200
      %1202 = vrot.lane.b32.xlu0 %v516, 20
      %v1203 = vpop.permute.xlu0 %1202
      %1204 = vrot.lane.b32.xlu0 %v517, 20
      %v1205 = vpop.permute.xlu0 %1204
      %1206 = vrot.lane.b32.xlu0 %v518, 20
      %v1207 = vpop.permute.xlu0 %1206
      %1208 = vrot.lane.b32.xlu0 %v519, 20
      %v1209 = vpop.permute.xlu0 %1208
      %1210 = vrot.lane.b32.xlu0 %v520, 20
      %v1211 = vpop.permute.xlu0 %1210
      %1212 = vrot.lane.b32.xlu0 %v521, 20
      %v1213 = vpop.permute.xlu0 %1212
      %1214 = vrot.lane.b32.xlu0 %v522, 20
      %v1215 = vpop.permute.xlu0 %1214
      %1216 = vrot.lane.b32.xlu0 %v523, 20
      %v1217 = vpop.permute.xlu0 %1216
      %1218 = vrot.lane.b32.xlu0 %v524, 20
      %v1219 = vpop.permute.xlu0 %1218
      %1220 = vrot.lane.b32.xlu0 %v525, 20
      %v1221 = vpop.permute.xlu0 %1220
      %1222 = vrot.lane.b32.xlu0 %v526, 20
      %v1223 = vpop.permute.xlu0 %1222
      %1224 = vrot.lane.b32.xlu0 %v527, 20
      %v1225 = vpop.permute.xlu0 %1224
      %1226 = vrot.lane.b32.xlu0 %v528, 20
      %v1227 = vpop.permute.xlu0 %1226
      %1228 = vrot.lane.b32.xlu0 %v529, 20
      %v1229 = vpop.permute.xlu0 %1228
      %1230 = vrot.lane.b32.xlu0 %v530, 20
      %v1231 = vpop.permute.xlu0 %1230
      %1232 = vrot.lane.b32.xlu0 %v531, 20
      %v1233 = vpop.permute.xlu0 %1232
      %1234 = vrot.lane.b32.xlu0 %v532, 20
      %v1235 = vpop.permute.xlu0 %1234
      %1236 = vrot.lane.b32.xlu0 %v533, 20
      %v1237 = vpop.permute.xlu0 %1236
      %1238 = vrot.lane.b32.xlu0 %v534, 20
      %v1239 = vpop.permute.xlu0 %1238
      %1304 = vrot.lane.b32.xlu0 %v536, 24
      %v1305 = vpop.permute.xlu0 %1304
      %1306 = vrot.lane.b32.xlu0 %v537, 24
      %v1307 = vpop.permute.xlu0 %1306
      %1308 = vrot.lane.b32.xlu0 %v538, 24
      %v1309 = vpop.permute.xlu0 %1308
      %1310 = vrot.lane.b32.xlu0 %v539, 24
      %v1311 = vpop.permute.xlu0 %1310
      %1312 = vrot.lane.b32.xlu0 %v540, 24
      %v1313 = vpop.permute.xlu0 %1312
      %1314 = vrot.lane.b32.xlu0 %v541, 24
      %v1315 = vpop.permute.xlu0 %1314
      %1316 = vrot.lane.b32.xlu0 %v542, 24
      %v1317 = vpop.permute.xlu0 %1316
      %1318 = vrot.lane.b32.xlu0 %v543, 24
      %v1319 = vpop.permute.xlu0 %1318
      %1320 = vrot.lane.b32.xlu0 %v544, 24
      %v1321 = vpop.permute.xlu0 %1320
      %1322 = vrot.lane.b32.xlu0 %v545, 24
      %v1323 = vpop.permute.xlu0 %1322
      %1324 = vrot.lane.b32.xlu0 %v546, 24
      %v1325 = vpop.permute.xlu0 %1324
      %1326 = vrot.lane.b32.xlu0 %v547, 24
      %v1327 = vpop.permute.xlu0 %1326
      %1328 = vrot.lane.b32.xlu0 %v548, 24
      %v1329 = vpop.permute.xlu0 %1328
      %1330 = vrot.lane.b32.xlu0 %v549, 24
      %v1331 = vpop.permute.xlu0 %1330
      %1332 = vrot.lane.b32.xlu0 %v550, 24
      %v1333 = vpop.permute.xlu0 %1332
      %1334 = vrot.lane.b32.xlu0 %v551, 24
      %v1335 = vpop.permute.xlu0 %1334
      %1336 = vrot.lane.b32.xlu0 %v552, 24
      %v1337 = vpop.permute.xlu0 %1336
      %1338 = vrot.lane.b32.xlu0 %v553, 24
      %v1339 = vpop.permute.xlu0 %1338
      %1340 = vrot.lane.b32.xlu0 %v554, 24
      %v1341 = vpop.permute.xlu0 %1340
      %1342 = vrot.lane.b32.xlu0 %v555, 24
      %v1343 = vpop.permute.xlu0 %1342
      %1344 = vrot.lane.b32.xlu0 %v556, 24
      %v1345 = vpop.permute.xlu0 %1344
      %1346 = vrot.lane.b32.xlu0 %v557, 24
      %v1347 = vpop.permute.xlu0 %1346
      %1348 = vrot.lane.b32.xlu0 %v558, 24
      %v1349 = vpop.permute.xlu0 %1348
      %1350 = vrot.lane.b32.xlu0 %v559, 24
      %v1351 = vpop.permute.xlu0 %1350
      %1352 = vrot.lane.b32.xlu0 %v560, 24
      %v1353 = vpop.permute.xlu0 %1352
      %1354 = vrot.lane.b32.xlu0 %v561, 24
      %v1355 = vpop.permute.xlu0 %1354
      %1356 = vrot.lane.b32.xlu0 %v562, 24
      %v1357 = vpop.permute.xlu0 %1356
      %1358 = vrot.lane.b32.xlu0 %v563, 24
      %v1359 = vpop.permute.xlu0 %1358
      %1360 = vrot.lane.b32.xlu0 %v564, 24
      %v1361 = vpop.permute.xlu0 %1360
      %1362 = vrot.lane.b32.xlu0 %v565, 24
      %v1363 = vpop.permute.xlu0 %1362
      %1364 = vrot.lane.b32.xlu0 %v566, 24
      %v1365 = vpop.permute.xlu0 %1364
      %1366 = vrot.lane.b32.xlu0 %v567, 24
      %v1367 = vpop.permute.xlu0 %1366
      %1432 = vrot.lane.b32.xlu0 %v568, 28
      %v1433 = vpop.permute.xlu0 %1432
      %1434 = vrot.lane.b32.xlu0 %v569, 28
      %v1435 = vpop.permute.xlu0 %1434
      %1436 = vrot.lane.b32.xlu0 %v570, 28
      %v1437 = vpop.permute.xlu0 %1436
      %1438 = vrot.lane.b32.xlu0 %v571, 28
      %v1439 = vpop.permute.xlu0 %1438
      %1440 = vrot.lane.b32.xlu0 %v572, 28
      %v1441 = vpop.permute.xlu0 %1440
      %1442 = vrot.lane.b32.xlu0 %v573, 28
      %v1443 = vpop.permute.xlu0 %1442
      %1444 = vrot.lane.b32.xlu0 %v574, 28
      %v1445 = vpop.permute.xlu0 %1444
      %1446 = vrot.lane.b32.xlu0 %v575, 28
      %v1447 = vpop.permute.xlu0 %1446
      %1448 = vrot.lane.b32.xlu0 %v576, 28
      %v1449 = vpop.permute.xlu0 %1448
      %1450 = vrot.lane.b32.xlu0 %v577, 28
      %v1451 = vpop.permute.xlu0 %1450
      %1452 = vrot.lane.b32.xlu0 %v578, 28
      %v1453 = vpop.permute.xlu0 %1452
      %1454 = vrot.lane.b32.xlu0 %v579, 28
      %v1455 = vpop.permute.xlu0 %1454
      %1456 = vrot.lane.b32.xlu0 %v580, 28
      %v1457 = vpop.permute.xlu0 %1456
      %1458 = vrot.lane.b32.xlu0 %v581, 28
      %v1459 = vpop.permute.xlu0 %1458
      %1460 = vrot.lane.b32.xlu0 %v582, 28
      %v1461 = vpop.permute.xlu0 %1460
      %1462 = vrot.lane.b32.xlu0 %v583, 28
      %v1463 = vpop.permute.xlu0 %1462
      %1464 = vrot.lane.b32.xlu0 %v584, 28
      %v1465 = vpop.permute.xlu0 %1464
      %1466 = vrot.lane.b32.xlu0 %v585, 28
      %v1467 = vpop.permute.xlu0 %1466
      %1468 = vrot.lane.b32.xlu0 %v586, 28
      %v1469 = vpop.permute.xlu0 %1468
      %1470 = vrot.lane.b32.xlu0 %v587, 28
      %v1471 = vpop.permute.xlu0 %1470
      %1472 = vrot.lane.b32.xlu0 %v588, 28
      %v1473 = vpop.permute.xlu0 %1472
      %1474 = vrot.lane.b32.xlu0 %v589, 28
      %v1475 = vpop.permute.xlu0 %1474
      %1476 = vrot.lane.b32.xlu0 %v590, 28
      %v1477 = vpop.permute.xlu0 %1476
      %1478 = vrot.lane.b32.xlu0 %v591, 28
      %v1479 = vpop.permute.xlu0 %1478
      %1480 = vrot.lane.b32.xlu0 %v592, 28
      %v1481 = vpop.permute.xlu0 %1480
      %1482 = vrot.lane.b32.xlu0 %v593, 28
      %v1483 = vpop.permute.xlu0 %1482
      %1484 = vrot.lane.b32.xlu0 %v594, 28
      %v1485 = vpop.permute.xlu0 %1484
      %1486 = vrot.lane.b32.xlu0 %v595, 28
      %v1487 = vpop.permute.xlu0 %1486
      %1488 = vrot.lane.b32.xlu0 %v596, 28
      %v1489 = vpop.permute.xlu0 %1488
      %1490 = vrot.lane.b32.xlu0 %v597, 28
      %v1491 = vpop.permute.xlu0 %1490
      %1492 = vrot.lane.b32.xlu0 %v598, 28
      %v1493 = vpop.permute.xlu0 %1492
      %1494 = vrot.lane.b32.xlu0 %v599, 28
      %v1495 = vpop.permute.xlu0 %1494
      %1560 = vrot.lane.b32.xlu0 %v600, 32
      %v1561 = vpop.permute.xlu0 %1560
      %1562 = vrot.lane.b32.xlu0 %v601, 32
      %v1563 = vpop.permute.xlu0 %1562
      %1564 = vrot.lane.b32.xlu0 %v602, 32
      %v1565 = vpop.permute.xlu0 %1564
      %1566 = vrot.lane.b32.xlu0 %v603, 32
      %v1567 = vpop.permute.xlu0 %1566
      %1568 = vrot.lane.b32.xlu0 %v604, 32
      %v1569 = vpop.permute.xlu0 %1568
      %1570 = vrot.lane.b32.xlu0 %v605, 32
      %v1571 = vpop.permute.xlu0 %1570
      %1572 = vrot.lane.b32.xlu0 %v606, 32
      %v1573 = vpop.permute.xlu0 %1572
      %1574 = vrot.lane.b32.xlu0 %v607, 32
      %v1575 = vpop.permute.xlu0 %1574
      %1576 = vrot.lane.b32.xlu0 %v608, 32
      %v1577 = vpop.permute.xlu0 %1576
      %1578 = vrot.lane.b32.xlu0 %v609, 32
      %v1579 = vpop.permute.xlu0 %1578
      %1580 = vrot.lane.b32.xlu0 %v610, 32
      %v1581 = vpop.permute.xlu0 %1580
      %1582 = vrot.lane.b32.xlu0 %v611, 32
      %v1583 = vpop.permute.xlu0 %1582
      %1584 = vrot.lane.b32.xlu0 %v612, 32
      %v1585 = vpop.permute.xlu0 %1584
      %1586 = vrot.lane.b32.xlu0 %v613, 32
      %v1587 = vpop.permute.xlu0 %1586
      %1588 = vrot.lane.b32.xlu0 %v614, 32
      %v1589 = vpop.permute.xlu0 %1588
      %1590 = vrot.lane.b32.xlu0 %v615, 32
      %v1591 = vpop.permute.xlu0 %1590
      %1592 = vrot.lane.b32.xlu0 %v616, 32
      %v1593 = vpop.permute.xlu0 %1592
      %1594 = vrot.lane.b32.xlu0 %v617, 32
      %v1595 = vpop.permute.xlu0 %1594
      %1596 = vrot.lane.b32.xlu0 %v618, 32
      %v1597 = vpop.permute.xlu0 %1596
      %1598 = vrot.lane.b32.xlu0 %v619, 32
      %v1599 = vpop.permute.xlu0 %1598
      %1600 = vrot.lane.b32.xlu0 %v620, 32
      %v1601 = vpop.permute.xlu0 %1600
      %1602 = vrot.lane.b32.xlu0 %v621, 32
      %v1603 = vpop.permute.xlu0 %1602
      %1604 = vrot.lane.b32.xlu0 %v622, 32
      %v1605 = vpop.permute.xlu0 %1604
      %1606 = vrot.lane.b32.xlu0 %v623, 32
      %v1607 = vpop.permute.xlu0 %1606
      %1608 = vrot.lane.b32.xlu0 %v624, 32
      %v1609 = vpop.permute.xlu0 %1608
      %1610 = vrot.lane.b32.xlu0 %v625, 32
      %v1611 = vpop.permute.xlu0 %1610
      %1612 = vrot.lane.b32.xlu0 %v626, 32
      %v1613 = vpop.permute.xlu0 %1612
      %1614 = vrot.lane.b32.xlu0 %v627, 32
      %v1615 = vpop.permute.xlu0 %1614
      %1616 = vrot.lane.b32.xlu0 %v628, 32
      %v1617 = vpop.permute.xlu0 %1616
      %1618 = vrot.lane.b32.xlu0 %v629, 32
      %v1619 = vpop.permute.xlu0 %1618
      %1620 = vrot.lane.b32.xlu0 %v630, 32
      %v1621 = vpop.permute.xlu0 %1620
      %1622 = vrot.lane.b32.xlu0 %v631, 32
      %v1623 = vpop.permute.xlu0 %1622
      %v1656 = vsel %vm222, %v343, %v665
      %v1657 = vsel %vm222, %v344, %v667
      %v1658 = vsel %vm222, %v345, %v669
      %v1659 = vsel %vm222, %v346, %v671
      %v1660 = vsel %vm222, %v347, %v673
      %v1661 = vsel %vm222, %v348, %v675
      %v1662 = vsel %vm222, %v349, %v677
      %v1663 = vsel %vm222, %v350, %v679
      %v1664 = vsel %vm222, %v351, %v681
      %v1665 = vsel %vm222, %v352, %v683
      %v1666 = vsel %vm222, %v353, %v685
      %v1667 = vsel %vm222, %v354, %v687
      %v1668 = vsel %vm222, %v355, %v689
      %v1669 = vsel %vm222, %v356, %v691
      %v1670 = vsel %vm222, %v357, %v693
      %v1671 = vsel %vm222, %v358, %v695
      %v1672 = vsel %vm222, %v359, %v697
      %v1673 = vsel %vm222, %v360, %v699
      %v1674 = vsel %vm222, %v361, %v701
      %v1675 = vsel %vm222, %v362, %v703
      %v1676 = vsel %vm222, %v363, %v705
      %v1677 = vsel %vm222, %v364, %v707
      %v1678 = vsel %vm222, %v365, %v709
      %v1679 = vsel %vm222, %v366, %v711
      %v1680 = vsel %vm222, %v367, %v713
      %v1681 = vsel %vm222, %v368, %v715
      %v1682 = vsel %vm222, %v369, %v717
      %v1683 = vsel %vm222, %v370, %v719
      %v1684 = vsel %vm222, %v371, %v721
      %v1685 = vsel %vm222, %v372, %v723
      %v1686 = vsel %vm222, %v373, %v725
      %v1687 = vsel %vm222, %v374, %v727
      %vm1688 = vcmask 64512
      %v1689 = vsel %vm1688, %v1656, %v793
      %v1690 = vsel %vm1688, %v1657, %v795
      %v1691 = vsel %vm1688, %v1658, %v797
      %v1692 = vsel %vm1688, %v1659, %v799
      %v1693 = vsel %vm1688, %v1660, %v801
      %v1694 = vsel %vm1688, %v1661, %v803
      %v1695 = vsel %vm1688, %v1662, %v805
      %v1696 = vsel %vm1688, %v1663, %v807
      %v1697 = vsel %vm1688, %v1664, %v809
      %v1698 = vsel %vm1688, %v1665, %v811
      %v1699 = vsel %vm1688, %v1666, %v813
      %v1700 = vsel %vm1688, %v1667, %v815
      %v1701 = vsel %vm1688, %v1668, %v817
      %v1702 = vsel %vm1688, %v1669, %v819
      %v1703 = vsel %vm1688, %v1670, %v821
      %v1704 = vsel %vm1688, %v1671, %v823
      %v1705 = vsel %vm1688, %v1672, %v825
      %v1706 = vsel %vm1688, %v1673, %v827
      %v1707 = vsel %vm1688, %v1674, %v829
      %v1708 = vsel %vm1688, %v1675, %v831
      %v1709 = vsel %vm1688, %v1676, %v833
      %v1710 = vsel %vm1688, %v1677, %v835
      %v1711 = vsel %vm1688, %v1678, %v837
      %v1712 = vsel %vm1688, %v1679, %v839
      %v1713 = vsel %vm1688, %v1680, %v841
      %v1714 = vsel %vm1688, %v1681, %v843
      %v1715 = vsel %vm1688, %v1682, %v845
      %v1716 = vsel %vm1688, %v1683, %v847
      %v1717 = vsel %vm1688, %v1684, %v849
      %v1718 = vsel %vm1688, %v1685, %v851
      %v1719 = vsel %vm1688, %v1686, %v853
      %v1720 = vsel %vm1688, %v1687, %v855
      %vm1721 = vcmask 97280
      %v1722 = vsel %vm1721, %v1689, %v921
      %v1723 = vsel %vm1721, %v1690, %v923
      %v1724 = vsel %vm1721, %v1691, %v925
      %v1725 = vsel %vm1721, %v1692, %v927
      %v1726 = vsel %vm1721, %v1693, %v929
      %v1727 = vsel %vm1721, %v1694, %v931
      %v1728 = vsel %vm1721, %v1695, %v933
      %v1729 = vsel %vm1721, %v1696, %v935
      %v1730 = vsel %vm1721, %v1697, %v937
      %v1731 = vsel %vm1721, %v1698, %v939
      %v1732 = vsel %vm1721, %v1699, %v941
      %v1733 = vsel %vm1721, %v1700, %v943
      %v1734 = vsel %vm1721, %v1701, %v945
      %v1735 = vsel %vm1721, %v1702, %v947
      %v1736 = vsel %vm1721, %v1703, %v949
      %v1737 = vsel %vm1721, %v1704, %v951
      %v1738 = vsel %vm1721, %v1705, %v953
      %v1739 = vsel %vm1721, %v1706, %v955
      %v1740 = vsel %vm1721, %v1707, %v957
      %v1741 = vsel %vm1721, %v1708, %v959
      %v1742 = vsel %vm1721, %v1709, %v961
      %v1743 = vsel %vm1721, %v1710, %v963
      %v1744 = vsel %vm1721, %v1711, %v965
      %v1745 = vsel %vm1721, %v1712, %v967
      %v1746 = vsel %vm1721, %v1713, %v969
      %v1747 = vsel %vm1721, %v1714, %v971
      %v1748 = vsel %vm1721, %v1715, %v973
      %v1749 = vsel %vm1721, %v1716, %v975
      %v1750 = vsel %vm1721, %v1717, %v977
      %v1751 = vsel %vm1721, %v1718, %v979
      %v1752 = vsel %vm1721, %v1719, %v981
      %v1753 = vsel %vm1721, %v1720, %v983
      %vm1754 = vcmask 130048
      %v1755 = vsel %vm1754, %v1722, %v1049
      %v1756 = vsel %vm1754, %v1723, %v1051
      %v1757 = vsel %vm1754, %v1724, %v1053
      %v1758 = vsel %vm1754, %v1725, %v1055
      %v1759 = vsel %vm1754, %v1726, %v1057
      %v1760 = vsel %vm1754, %v1727, %v1059
      %v1761 = vsel %vm1754, %v1728, %v1061
      %v1762 = vsel %vm1754, %v1729, %v1063
      %v1763 = vsel %vm1754, %v1730, %v1065
      %v1764 = vsel %vm1754, %v1731, %v1067
      %v1765 = vsel %vm1754, %v1732, %v1069
      %v1766 = vsel %vm1754, %v1733, %v1071
      %v1767 = vsel %vm1754, %v1734, %v1073
      %v1768 = vsel %vm1754, %v1735, %v1075
      %v1769 = vsel %vm1754, %v1736, %v1077
      %v1770 = vsel %vm1754, %v1737, %v1079
      %v1771 = vsel %vm1754, %v1738, %v1081
      %v1772 = vsel %vm1754, %v1739, %v1083
      %v1773 = vsel %vm1754, %v1740, %v1085
      %v1774 = vsel %vm1754, %v1741, %v1087
      %v1775 = vsel %vm1754, %v1742, %v1089
      %v1776 = vsel %vm1754, %v1743, %v1091
      %v1777 = vsel %vm1754, %v1744, %v1093
      %v1778 = vsel %vm1754, %v1745, %v1095
      %v1779 = vsel %vm1754, %v1746, %v1097
      %v1780 = vsel %vm1754, %v1747, %v1099
      %v1781 = vsel %vm1754, %v1748, %v1101
      %v1782 = vsel %vm1754, %v1749, %v1103
      %v1783 = vsel %vm1754, %v1750, %v1105
      %v1784 = vsel %vm1754, %v1751, %v1107
      %v1785 = vsel %vm1754, %v1752, %v1109
      %v1786 = vsel %vm1754, %v1753, %v1111
      %vm1787 = vcmask 162816
      %v1788 = vsel %vm1787, %v1755, %v1177
      %v1789 = vsel %vm1787, %v1756, %v1179
      %v1790 = vsel %vm1787, %v1757, %v1181
      %v1791 = vsel %vm1787, %v1758, %v1183
      %v1792 = vsel %vm1787, %v1759, %v1185
      %v1793 = vsel %vm1787, %v1760, %v1187
      %v1794 = vsel %vm1787, %v1761, %v1189
      %v1795 = vsel %vm1787, %v1762, %v1191
      %v1796 = vsel %vm1787, %v1763, %v1193
      %v1797 = vsel %vm1787, %v1764, %v1195
      %v1798 = vsel %vm1787, %v1765, %v1197
      %v1799 = vsel %vm1787, %v1766, %v1199
      %v1800 = vsel %vm1787, %v1767, %v1201
      %v1801 = vsel %vm1787, %v1768, %v1203
      %v1802 = vsel %vm1787, %v1769, %v1205
      %v1803 = vsel %vm1787, %v1770, %v1207
      %v1804 = vsel %vm1787, %v1771, %v1209
      %v1805 = vsel %vm1787, %v1772, %v1211
      %v1806 = vsel %vm1787, %v1773, %v1213
      %v1807 = vsel %vm1787, %v1774, %v1215
      %v1808 = vsel %vm1787, %v1775, %v1217
      %v1809 = vsel %vm1787, %v1776, %v1219
      %v1810 = vsel %vm1787, %v1777, %v1221
      %v1811 = vsel %vm1787, %v1778, %v1223
      %v1812 = vsel %vm1787, %v1779, %v1225
      %v1813 = vsel %vm1787, %v1780, %v1227
      %v1814 = vsel %vm1787, %v1781, %v1229
      %v1815 = vsel %vm1787, %v1782, %v1231
      %v1816 = vsel %vm1787, %v1783, %v1233
      %v1817 = vsel %vm1787, %v1784, %v1235
      %v1818 = vsel %vm1787, %v1785, %v1237
      %v1819 = vsel %vm1787, %v1786, %v1239
      %vm1820 = vcmask 195584
      %v1821 = vsel %vm1820, %v1788, %v1305
      %v1822 = vsel %vm1820, %v1789, %v1307
      %v1823 = vsel %vm1820, %v1790, %v1309
      %v1824 = vsel %vm1820, %v1791, %v1311
      %v1825 = vsel %vm1820, %v1792, %v1313
      %v1826 = vsel %vm1820, %v1793, %v1315
      %v1827 = vsel %vm1820, %v1794, %v1317
      %v1828 = vsel %vm1820, %v1795, %v1319
      %v1829 = vsel %vm1820, %v1796, %v1321
      %v1830 = vsel %vm1820, %v1797, %v1323
      %v1831 = vsel %vm1820, %v1798, %v1325
      %v1832 = vsel %vm1820, %v1799, %v1327
      %v1833 = vsel %vm1820, %v1800, %v1329
      %v1834 = vsel %vm1820, %v1801, %v1331
      %v1835 = vsel %vm1820, %v1802, %v1333
      %v1836 = vsel %vm1820, %v1803, %v1335
      %v1837 = vsel %vm1820, %v1804, %v1337
      %v1838 = vsel %vm1820, %v1805, %v1339
      %v1839 = vsel %vm1820, %v1806, %v1341
      %v1840 = vsel %vm1820, %v1807, %v1343
      %v1841 = vsel %vm1820, %v1808, %v1345
      %v1842 = vsel %vm1820, %v1809, %v1347
      %v1843 = vsel %vm1820, %v1810, %v1349
      %v1844 = vsel %vm1820, %v1811, %v1351
      %v1845 = vsel %vm1820, %v1812, %v1353
      %v1846 = vsel %vm1820, %v1813, %v1355
      %v1847 = vsel %vm1820, %v1814, %v1357
      %v1848 = vsel %vm1820, %v1815, %v1359
      %v1849 = vsel %vm1820, %v1816, %v1361
      %v1850 = vsel %vm1820, %v1817, %v1363
      %v1851 = vsel %vm1820, %v1818, %v1365
      %v1852 = vsel %vm1820, %v1819, %v1367
      %vm1853 = vcmask 228352
      %v1854 = vsel %vm1853, %v1821, %v1433
      %v1855 = vsel %vm1853, %v1822, %v1435
      %v1856 = vsel %vm1853, %v1823, %v1437
      %v1857 = vsel %vm1853, %v1824, %v1439
      %v1858 = vsel %vm1853, %v1825, %v1441
      %v1859 = vsel %vm1853, %v1826, %v1443
      %v1860 = vsel %vm1853, %v1827, %v1445
      %v1861 = vsel %vm1853, %v1828, %v1447
      %v1862 = vsel %vm1853, %v1829, %v1449
      %v1863 = vsel %vm1853, %v1830, %v1451
      %v1864 = vsel %vm1853, %v1831, %v1453
      %v1865 = vsel %vm1853, %v1832, %v1455
      %v1866 = vsel %vm1853, %v1833, %v1457
      %v1867 = vsel %vm1853, %v1834, %v1459
      %v1868 = vsel %vm1853, %v1835, %v1461
      %v1869 = vsel %vm1853, %v1836, %v1463
      %v1870 = vsel %vm1853, %v1837, %v1465
      %v1871 = vsel %vm1853, %v1838, %v1467
      %v1872 = vsel %vm1853, %v1839, %v1469
      %v1873 = vsel %vm1853, %v1840, %v1471
      %v1874 = vsel %vm1853, %v1841, %v1473
      %v1875 = vsel %vm1853, %v1842, %v1475
      %v1876 = vsel %vm1853, %v1843, %v1477
      %v1877 = vsel %vm1853, %v1844, %v1479
      %v1878 = vsel %vm1853, %v1845, %v1481
      %v1879 = vsel %vm1853, %v1846, %v1483
      %v1880 = vsel %vm1853, %v1847, %v1485
      %v1881 = vsel %vm1853, %v1848, %v1487
      %v1882 = vsel %vm1853, %v1849, %v1489
      %v1883 = vsel %vm1853, %v1850, %v1491
      %v1884 = vsel %vm1853, %v1851, %v1493
      %v1885 = vsel %vm1853, %v1852, %v1495
      %vm1886 = vcmask 261120
      %v1887 = vsel %vm1886, %v1854, %v1561
      %v1888 = vsel %vm1886, %v1855, %v1563
      %v1889 = vsel %vm1886, %v1856, %v1565
      %v1890 = vsel %vm1886, %v1857, %v1567
      %v1891 = vsel %vm1886, %v1858, %v1569
      %v1892 = vsel %vm1886, %v1859, %v1571
      %v1893 = vsel %vm1886, %v1860, %v1573
      %v1894 = vsel %vm1886, %v1861, %v1575
      %v1895 = vsel %vm1886, %v1862, %v1577
      %v1896 = vsel %vm1886, %v1863, %v1579
      %v1897 = vsel %vm1886, %v1864, %v1581
      %v1898 = vsel %vm1886, %v1865, %v1583
      %v1899 = vsel %vm1886, %v1866, %v1585
      %v1900 = vsel %vm1886, %v1867, %v1587
      %v1901 = vsel %vm1886, %v1868, %v1589
      %v1902 = vsel %vm1886, %v1869, %v1591
      %v1903 = vsel %vm1886, %v1870, %v1593
      %v1904 = vsel %vm1886, %v1871, %v1595
      %v1905 = vsel %vm1886, %v1872, %v1597
      %v1906 = vsel %vm1886, %v1873, %v1599
      %v1907 = vsel %vm1886, %v1874, %v1601
      %v1908 = vsel %vm1886, %v1875, %v1603
      %v1909 = vsel %vm1886, %v1876, %v1605
      %v1910 = vsel %vm1886, %v1877, %v1607
      %v1911 = vsel %vm1886, %v1878, %v1609
      %v1912 = vsel %vm1886, %v1879, %v1611
      %v1913 = vsel %vm1886, %v1880, %v1613
      %v1914 = vsel %vm1886, %v1881, %v1615
      %v1915 = vsel %vm1886, %v1882, %v1617
      %v1916 = vsel %vm1886, %v1883, %v1619
      %v1917 = vsel %vm1886, %v1884, %v1621
      %v1918 = vsel %vm1886, %v1885, %v1623
      %v1919 = vld [vmem:[%s210] sm:$0xff]
      %v1920 = vld [vmem:[%s210 + $0x8] sm:$0xff]
      %v1921 = vld [vmem:[%s210 + $0x10] sm:$0xff]
      %v1922 = vld [vmem:[%s210 + $0x18] sm:$0xff]
      %v1923 = vld [vmem:[%s210 + $0x20] sm:$0xf]
      %v1924 = vld [vmem:[%s213] sm:$0x1]
      %v1926 = vlaneseq
      %v1927 = vshrl.u32 %v1926, 7
      %v1928 = vsub.s32 0, %v1927
      %v1929 = vrot.slane %v1924, %v1928
      %vm1931 = vcmask 293888
      %v1933 = vsel %vm1931, %v1887, 0
      %v1936 = vsel %vm1931, %v1888, 0
      %v1939 = vsel %vm1931, %v1889, 0
      %v1942 = vsel %vm1931, %v1890, 0
      %v1945 = vsel %vm1931, %v1891, 0
      %v1948 = vsel %vm1931, %v1892, 0
      %v1951 = vsel %vm1931, %v1893, 0
      %v1954 = vsel %vm1931, %v1894, 0
      %v1957 = vsel %vm1931, %v1895, 0
      %v1960 = vsel %vm1931, %v1896, 0
      %v1963 = vsel %vm1931, %v1897, 0
      %v1966 = vsel %vm1931, %v1898, 0
      %v1969 = vsel %vm1931, %v1899, 0
      %v1972 = vsel %vm1931, %v1900, 0
      %v1975 = vsel %vm1931, %v1901, 0
      %v1978 = vsel %vm1931, %v1902, 0
      %v1981 = vsel %vm1931, %v1903, 0
      %v1984 = vsel %vm1931, %v1904, 0
      %v1987 = vsel %vm1931, %v1905, 0
      %v1990 = vsel %vm1931, %v1906, 0
      %v1993 = vsel %vm1931, %v1907, 0
      %v1996 = vsel %vm1931, %v1908, 0
      %v1999 = vsel %vm1931, %v1909, 0
      %v2002 = vsel %vm1931, %v1910, 0
      %v2005 = vsel %vm1931, %v1911, 0
      %v2008 = vsel %vm1931, %v1912, 0
      %v2011 = vsel %vm1931, %v1913, 0
      %v2014 = vsel %vm1931, %v1914, 0
      %v2017 = vsel %vm1931, %v1915, 0
      %v2020 = vsel %vm1931, %v1916, 0
      %v2023 = vsel %vm1931, %v1917, 0
      %v2026 = vsel %vm1931, %v1918, 0
      %vm2028 = vcmask 1043456
      %v2030 = vsel %vm2028, %v1923, 0
      %2032 = vmatprep.subr.mxu0 0.0
      %2033 = vmatpush1.msra.mxu0 0.0
      %2034 = vmatprep.subr.mxu0 0.0
      %2035 = vmatpush1.msra.mxu0 0.0
      %2036 = vmatprep.subr.mxu0 0.0
      %2037 = vmatpush1.msra.mxu0 0.0
      %2038 = vmatprep.subr.mxu0 0.0
      %2039 = vmatpush1.msra.mxu0 0.0
      %2040 = vmatprep.subr.mxu0 0.0
      %2041 = vmatpush1.msra.mxu0 0.0
      %2042 = vmatprep.subr.mxu0 0.0
      %2043 = vmatpush1.msra.mxu0 0.0
      %2044 = vmatprep.subr.mxu0 0.0
      %2045 = vmatpush1.msra.mxu0 0.0
      %2046 = vmatprep.subr.mxu0 0.0
      %2047 = vmatpush1.msra.mxu0 0.0
      %2048 = vmatprep.subr.mxu0 0.0
      %2049 = vmatpush1.msra.mxu0 0.0
      %2050 = vmatprep.subr.mxu0 0.0
      %2051 = vmatpush1.msra.mxu0 0.0
      %2052 = vmatprep.subr.mxu0 0.0
      %2053 = vmatpush1.msra.mxu0 0.0
      %2054 = vmatprep.subr.mxu0 0.0
      %2055 = vmatpush1.msra.mxu0 %v2030
      %2056 = vmatprep.subr.mxu0 0.0
      %2057 = vmatpush1.msra.mxu0 %v1922
      %2058 = vmatprep.subr.mxu0 0.0
      %2059 = vmatpush1.msra.mxu0 %v1921
      %2060 = vmatprep.subr.mxu0 0.0
      %2061 = vmatpush1.msra.mxu0 %v1920
      %2062 = vmatprep.subr.mxu0 0.0
      %2063 = vmatpush1.msra.mxu0 %v1919
      %2064 = vmatprep.subr.mxu0 0.0
      %2065 = vmatpush2.msra.mxu0 0.0
      %2066 = vmatprep.subr.mxu0 0.0
      %2067 = vmatpush2.msra.mxu0 0.0
      %2068 = vmatprep.subr.mxu0 0.0
      %2069 = vmatpush2.msra.mxu0 0.0
      %2070 = vmatprep.subr.mxu0 0.0
      %2071 = vmatpush2.msra.mxu0 0.0
      %2072 = vmatprep.subr.mxu0 0.0
      %2073 = vmatpush2.msra.mxu0 0.0
      %2074 = vmatprep.subr.mxu0 0.0
      %2075 = vmatpush2.msra.mxu0 0.0
      %2076 = vmatprep.subr.mxu0 0.0
      %2077 = vmatpush2.msra.mxu0 0.0
      %2078 = vmatprep.subr.mxu0 0.0
      %2079 = vmatpush2.msra.mxu0 0.0
      %2080 = vmatprep.subr.mxu0 0.0
      %2081 = vmatpush2.msra.mxu0 0.0
      %2082 = vmatprep.subr.mxu0 0.0
      %2083 = vmatpush2.msra.mxu0 0.0
      %2084 = vmatprep.subr.mxu0 0.0
      %2085 = vmatpush2.msra.mxu0 0.0
      %2086 = vmatprep.subr.mxu0 0.0
      %2087 = vmatpush2.msra.mxu0 0.0
      %2088 = vmatprep.subr.mxu0 0.0
      %2089 = vmatpush2.msra.mxu0 0.0
      %2090 = vmatprep.subr.mxu0 0.0
      %2091 = vmatpush2.msra.mxu0 0.0
      %2092 = vmatprep.subr.mxu0 0.0
      %2093 = vmatpush2.msra.mxu0 0.0
      %2094 = vmatprep.subr.mxu0 0.0
      %2095 = vmatpush2.msra.mxu0 0.0
      %2096 = vmatprep.mubr.f32.mxu0 0.0
      %2097 = vmatmul.mubr.f32.gmra.mxu0 %v1933
      %v2098 = vpop.f32.mrf.mxu0
      %v2099 = vadd.f32 %v1929, %v2098
      %v2100 = vpop.f32.mrf.mxu0
      %2101 = vmatprep.mubr.f32.mxu0 0.0
      %2102 = vmatmul.mubr.f32.gmra.mxu0 %v1936
      %v2103 = vpop.f32.mrf.mxu0
      %v2104 = vadd.f32 %v1929, %v2103
      %v2105 = vpop.f32.mrf.mxu0
      %2106 = vmatprep.mubr.f32.mxu0 0.0
      %2107 = vmatmul.mubr.f32.gmra.mxu0 %v1939
      %v2108 = vpop.f32.mrf.mxu0
      %v2109 = vadd.f32 %v1929, %v2108
      %v2110 = vpop.f32.mrf.mxu0
      %2111 = vmatprep.mubr.f32.mxu0 0.0
      %2112 = vmatmul.mubr.f32.gmra.mxu0 %v1942
      %v2113 = vpop.f32.mrf.mxu0
      %v2114 = vadd.f32 %v1929, %v2113
      %v2115 = vpop.f32.mrf.mxu0
      %2116 = vmatprep.mubr.f32.mxu0 0.0
      %2117 = vmatmul.mubr.f32.gmra.mxu0 %v1945
      %v2118 = vpop.f32.mrf.mxu0
      %v2119 = vadd.f32 %v1929, %v2118
      %v2120 = vpop.f32.mrf.mxu0
      %2121 = vmatprep.mubr.f32.mxu0 0.0
      %2122 = vmatmul.mubr.f32.gmra.mxu0 %v1948
      %v2123 = vpop.f32.mrf.mxu0
      %v2124 = vadd.f32 %v1929, %v2123
      %v2125 = vpop.f32.mrf.mxu0
      %2126 = vmatprep.mubr.f32.mxu0 0.0
      %2127 = vmatmul.mubr.f32.gmra.mxu0 %v1951
      %v2128 = vpop.f32.mrf.mxu0
      %v2129 = vadd.f32 %v1929, %v2128
      %v2130 = vpop.f32.mrf.mxu0
      %2131 = vmatprep.mubr.f32.mxu0 0.0
      %2132 = vmatmul.mubr.f32.gmra.mxu0 %v1954
      %v2133 = vpop.f32.mrf.mxu0
      %v2134 = vadd.f32 %v1929, %v2133
      %v2135 = vpop.f32.mrf.mxu0
      %2136 = vmatprep.mubr.f32.mxu0 0.0
      %2137 = vmatmul.mubr.f32.gmra.mxu0 %v1957
      %v2138 = vpop.f32.mrf.mxu0
      %v2139 = vadd.f32 %v1929, %v2138
      %v2140 = vpop.f32.mrf.mxu0
      %2141 = vmatprep.mubr.f32.mxu0 0.0
      %2142 = vmatmul.mubr.f32.gmra.mxu0 %v1960
      %v2143 = vpop.f32.mrf.mxu0
      %v2144 = vadd.f32 %v1929, %v2143
      %v2145 = vpop.f32.mrf.mxu0
      %2146 = vmatprep.mubr.f32.mxu0 0.0
      %2147 = vmatmul.mubr.f32.gmra.mxu0 %v1963
      %v2148 = vpop.f32.mrf.mxu0
      %v2149 = vadd.f32 %v1929, %v2148
      %v2150 = vpop.f32.mrf.mxu0
      %2151 = vmatprep.mubr.f32.mxu0 0.0
      %2152 = vmatmul.mubr.f32.gmra.mxu0 %v1966
      %v2153 = vpop.f32.mrf.mxu0
      %v2154 = vadd.f32 %v1929, %v2153
      %v2155 = vpop.f32.mrf.mxu0
      %2156 = vmatprep.mubr.f32.mxu0 0.0
      %2157 = vmatmul.mubr.f32.gmra.mxu0 %v1969
      %v2158 = vpop.f32.mrf.mxu0
      %v2159 = vadd.f32 %v1929, %v2158
      %v2160 = vpop.f32.mrf.mxu0
      %2161 = vmatprep.mubr.f32.mxu0 0.0
      %2162 = vmatmul.mubr.f32.gmra.mxu0 %v1972
      %v2163 = vpop.f32.mrf.mxu0
      %v2164 = vadd.f32 %v1929, %v2163
      %v2165 = vpop.f32.mrf.mxu0
      %2166 = vmatprep.mubr.f32.mxu0 0.0
      %2167 = vmatmul.mubr.f32.gmra.mxu0 %v1975
      %v2168 = vpop.f32.mrf.mxu0
      %v2169 = vadd.f32 %v1929, %v2168
      %v2170 = vpop.f32.mrf.mxu0
      %2171 = vmatprep.mubr.f32.mxu0 0.0
      %2172 = vmatmul.mubr.f32.gmra.mxu0 %v1978
      %v2173 = vpop.f32.mrf.mxu0
      %v2174 = vadd.f32 %v1929, %v2173
      %v2175 = vpop.f32.mrf.mxu0
      %2176 = vmatprep.mubr.f32.mxu0 0.0
      %2177 = vmatmul.mubr.f32.gmra.mxu0 %v1981
      %v2178 = vpop.f32.mrf.mxu0
      %v2179 = vadd.f32 %v1929, %v2178
      %v2180 = vpop.f32.mrf.mxu0
      %2181 = vmatprep.mubr.f32.mxu0 0.0
      %2182 = vmatmul.mubr.f32.gmra.mxu0 %v1984
      %v2183 = vpop.f32.mrf.mxu0
      %v2184 = vadd.f32 %v1929, %v2183
      %v2185 = vpop.f32.mrf.mxu0
      %2186 = vmatprep.mubr.f32.mxu0 0.0
      %2187 = vmatmul.mubr.f32.gmra.mxu0 %v1987
      %v2188 = vpop.f32.mrf.mxu0
      %v2189 = vadd.f32 %v1929, %v2188
      %v2190 = vpop.f32.mrf.mxu0
      %2191 = vmatprep.mubr.f32.mxu0 0.0
      %2192 = vmatmul.mubr.f32.gmra.mxu0 %v1990
      %v2193 = vpop.f32.mrf.mxu0
      %v2194 = vadd.f32 %v1929, %v2193
      %v2195 = vpop.f32.mrf.mxu0
      %2196 = vmatprep.mubr.f32.mxu0 0.0
      %2197 = vmatmul.mubr.f32.gmra.mxu0 %v1993
      %v2198 = vpop.f32.mrf.mxu0
      %v2199 = vadd.f32 %v1929, %v2198
      %v2200 = vpop.f32.mrf.mxu0
      %2201 = vmatprep.mubr.f32.mxu0 0.0
      %2202 = vmatmul.mubr.f32.gmra.mxu0 %v1996
      %v2203 = vpop.f32.mrf.mxu0
      %v2204 = vadd.f32 %v1929, %v2203
      %v2205 = vpop.f32.mrf.mxu0
      %2206 = vmatprep.mubr.f32.mxu0 0.0
      %2207 = vmatmul.mubr.f32.gmra.mxu0 %v1999
      %v2208 = vpop.f32.mrf.mxu0
      %v2209 = vadd.f32 %v1929, %v2208
      %v2210 = vpop.f32.mrf.mxu0
      %2211 = vmatprep.mubr.f32.mxu0 0.0
      %2212 = vmatmul.mubr.f32.gmra.mxu0 %v2002
      %v2213 = vpop.f32.mrf.mxu0
      %v2214 = vadd.f32 %v1929, %v2213
      %v2215 = vpop.f32.mrf.mxu0
      %2216 = vmatprep.mubr.f32.mxu0 0.0
      %2217 = vmatmul.mubr.f32.gmra.mxu0 %v2005
      %v2218 = vpop.f32.mrf.mxu0
      %v2219 = vadd.f32 %v1929, %v2218
      %v2220 = vpop.f32.mrf.mxu0
      %2221 = vmatprep.mubr.f32.mxu0 0.0
      %2222 = vmatmul.mubr.f32.gmra.mxu0 %v2008
      %v2223 = vpop.f32.mrf.mxu0
      %v2224 = vadd.f32 %v1929, %v2223
      %v2225 = vpop.f32.mrf.mxu0
      %2226 = vmatprep.mubr.f32.mxu0 0.0
      %2227 = vmatmul.mubr.f32.gmra.mxu0 %v2011
      %v2228 = vpop.f32.mrf.mxu0
      %v2229 = vadd.f32 %v1929, %v2228
      %v2230 = vpop.f32.mrf.mxu0
      %2231 = vmatprep.mubr.f32.mxu0 0.0
      %2232 = vmatmul.mubr.f32.gmra.mxu0 %v2014
      %v2233 = vpop.f32.mrf.mxu0
      %v2234 = vadd.f32 %v1929, %v2233
      %v2235 = vpop.f32.mrf.mxu0
      %2236 = vmatprep.mubr.f32.mxu0 0.0
      %2237 = vmatmul.mubr.f32.gmra.mxu0 %v2017
      %v2238 = vpop.f32.mrf.mxu0
      %v2239 = vadd.f32 %v1929, %v2238
      %v2240 = vpop.f32.mrf.mxu0
      %2241 = vmatprep.mubr.f32.mxu0 0.0
      %2242 = vmatmul.mubr.f32.gmra.mxu0 %v2020
      %v2243 = vpop.f32.mrf.mxu0
      %v2244 = vadd.f32 %v1929, %v2243
      %v2245 = vpop.f32.mrf.mxu0
      %2246 = vmatprep.mubr.f32.mxu0 0.0
      %2247 = vmatmul.mubr.f32.gmra.mxu0 %v2023
      %v2248 = vpop.f32.mrf.mxu0
      %v2249 = vadd.f32 %v1929, %v2248
      %v2250 = vpop.f32.mrf.mxu0
      %2251 = vmatprep.mubr.f32.mxu0 0.0
      %2252 = vmatmul.mubr.f32.gmra.mxu0 %v2026
      %v2253 = vpop.f32.mrf.mxu0
      %v2254 = vadd.f32 %v1929, %v2253
      %v2255 = vpop.f32.mrf.mxu0
      %2256 = vdwg.mxu0
      %v2257 = vmax.f32 %v2099, 0.0
      %v2258 = vmax.f32 %v2104, 0.0
      %v2259 = vmax.f32 %v2109, 0.0
      %v2260 = vmax.f32 %v2114, 0.0
      %v2261 = vmax.f32 %v2119, 0.0
      %v2262 = vmax.f32 %v2124, 0.0
      %v2263 = vmax.f32 %v2129, 0.0
      %v2264 = vmax.f32 %v2134, 0.0
      %v2265 = vmax.f32 %v2139, 0.0
      %v2266 = vmax.f32 %v2144, 0.0
      %v2267 = vmax.f32 %v2149, 0.0
      %v2268 = vmax.f32 %v2154, 0.0
      %v2269 = vmax.f32 %v2159, 0.0
      %v2270 = vmax.f32 %v2164, 0.0
      %v2271 = vmax.f32 %v2169, 0.0
      %v2272 = vmax.f32 %v2174, 0.0
      %v2273 = vmax.f32 %v2179, 0.0
      %v2274 = vmax.f32 %v2184, 0.0
      %v2275 = vmax.f32 %v2189, 0.0
      %v2276 = vmax.f32 %v2194, 0.0
      %v2277 = vmax.f32 %v2199, 0.0
      %v2278 = vmax.f32 %v2204, 0.0
      %v2279 = vmax.f32 %v2209, 0.0
      %v2280 = vmax.f32 %v2214, 0.0
      %v2281 = vmax.f32 %v2219, 0.0
      %v2282 = vmax.f32 %v2224, 0.0
      %v2283 = vmax.f32 %v2229, 0.0
      %v2284 = vmax.f32 %v2234, 0.0
      %v2285 = vmax.f32 %v2239, 0.0
      %v2286 = vmax.f32 %v2244, 0.0
      %v2287 = vmax.f32 %v2249, 0.0
      %v2288 = vmax.f32 %v2254, 0.0
      %2289 = vst [vmem:[%s221] sm:$0xff] %v2257
      %2290 = vst [vmem:[%s221 + $0x8] sm:$0xff] %v2258
      %2291 = vst [vmem:[%s221 + $0x10] sm:$0xff] %v2259
      %2292 = vst [vmem:[%s221 + $0x18] sm:$0xff] %v2260
      %2293 = vst [vmem:[%s221 + $0x20] sm:$0xff] %v2261
      %2294 = vst [vmem:[%s221 + $0x28] sm:$0xff] %v2262
      %2295 = vst [vmem:[%s221 + $0x30] sm:$0xff] %v2263
      %2296 = vst [vmem:[%s221 + $0x38] sm:$0xff] %v2264
      %2297 = vst [vmem:[%s221 + $0x40] sm:$0xff] %v2265
      %2298 = vst [vmem:[%s221 + $0x48] sm:$0xff] %v2266
      %2299 = vst [vmem:[%s221 + $0x50] sm:$0xff] %v2267
      %2300 = vst [vmem:[%s221 + $0x58] sm:$0xff] %v2268
      %2301 = vst [vmem:[%s221 + $0x60] sm:$0xff] %v2269
      %2302 = vst [vmem:[%s221 + $0x68] sm:$0xff] %v2270
      %2303 = vst [vmem:[%s221 + $0x70] sm:$0xff] %v2271
      %2304 = vst [vmem:[%s221 + $0x78] sm:$0xff] %v2272
      %2305 = vst [vmem:[%s221 + $0x80] sm:$0xff] %v2273
      %2306 = vst [vmem:[%s221 + $0x88] sm:$0xff] %v2274
      %2307 = vst [vmem:[%s221 + $0x90] sm:$0xff] %v2275
      %2308 = vst [vmem:[%s221 + $0x98] sm:$0xff] %v2276
      %2309 = vst [vmem:[%s221 + $0xa0] sm:$0xff] %v2277
      %2310 = vst [vmem:[%s221 + $0xa8] sm:$0xff] %v2278
      %2311 = vst [vmem:[%s221 + $0xb0] sm:$0xff] %v2279
      %2312 = vst [vmem:[%s221 + $0xb8] sm:$0xff] %v2280
      %2313 = vst [vmem:[%s221 + $0xc0] sm:$0xff] %v2281
      %2314 = vst [vmem:[%s221 + $0xc8] sm:$0xff] %v2282
      %2315 = vst [vmem:[%s221 + $0xd0] sm:$0xff] %v2283
      %2316 = vst [vmem:[%s221 + $0xd8] sm:$0xff] %v2284
      %2317 = vst [vmem:[%s221 + $0xe0] sm:$0xff] %v2285
      %2318 = vst [vmem:[%s221 + $0xe8] sm:$0xff] %v2286
      %2319 = vst [vmem:[%s221 + $0xf0] sm:$0xff] %v2287
      %2320 = vst [vmem:[%s221 + $0xf8] sm:$0xff] %v2288
      %p2321 = scmp.lt.s32.totalorder %s18, 1
      %s2322 = scalar_select %p2321, %s18, 1
      %p2323 = scmp.lt.s32.totalorder %s19, 0
      %s2324 = scalar_select %p2323, %s19, 0
      %s2325 = smul.addr %s2322, 32
      %s2326 = sadd.s32 %s2324, %s2325
      %s2327 = smul.addr %s2326, 8
      %s2328 = scalar_lea.vmem %s3, %s2327
      // Predicated region
      $region33: #{convolutional_layer_nhwc.1} parent=31 // pred_check
        %p2329 = pneg %p124
      $region34: #{convolutional_layer_nhwc.1} parent=31 // pred_check_branch
        %2331 = sbr.rel (%p2329) target = $region36
      $region35: #{convolutional_layer_nhwc.1} parent=31 // pred_region
        _
      $region36: #{convolutional_layer_nhwc.1} parent=31 // pred_fallthru
        _
    $region32: #{convolutional_layer_nhwc.1} parent=5 // pred_fallthru
      _
    %p2332 = scmp.le.s32.totalorder 2, %s9
    // Predicated region
    $region37: #{convolutional_layer_nhwc.1} parent=5 // pred_check
      %p2333 = pneg %p2332
    $region38: #{convolutional_layer_nhwc.1} parent=5 // pred_check_branch
      %2335 = sbr.rel (%p2333) target = $region40
    $region39: #{convolutional_layer_nhwc.1} parent=5 // pred_region
      %s2336 = ssub.s32 %s9, 2
      // Predicated region
      $region41: #{convolutional_layer_nhwc.1} parent=39 // pred_check
        %p2337 = pneg %p130
      $region42: #{convolutional_layer_nhwc.1} parent=39 // pred_check_branch
        %2339 = sbr.rel (%p2337) target = $region44
      $region43: #{convolutional_layer_nhwc.1} parent=39 // pred_region
        %p2340 = scmp.lt.s32.totalorder %s20, 1
        %s2341 = scalar_select %p2340, %s20, 1
        %p2342 = scmp.lt.s32.totalorder %s21, 0
        %s2343 = scalar_select %p2342, %s21, 0
        %s2344 = smul.addr %s2341, 32
        %s2345 = sadd.s32 %s2343, %s2344
        %s2346 = smul.addr %s2345, 8
        %s2347 = scalar_lea.vmem %s3, %s2346
      $region44: #{convolutional_layer_nhwc.1} parent=39 // pred_fallthru
        _
    $region40: #{convolutional_layer_nhwc.1} parent=5 // pred_fallthru
      _
  $region6: #{convolutional_layer_nhwc.1} parent=0 // loop_footer
    %s13 = sadd.s32 1, %s9
  $region7: #{convolutional_layer_nhwc.1} parent=0 // loop_footer_branch
    %8 = sbr.rel target = $region3
  $region8: #{convolutional_layer_nhwc.1} parent=0 // loop_exit
    _

</llo_original>
